<compile_context>
chip_gen: v5e
topology: v5e:2x2
jax: 0.10.0
libtpu: 0.0.40
codegen_flags: <defaults>
</compile_context>

<pallas_src>
import functools

import jax
import jax.numpy as jnp
from jax.experimental import pallas as pl
from jax.experimental.pallas import tpu as pltpu

DILATIONS = (1, 2, 4)
BN_EPS = 1e-5


# -----------------------------------------------------------------------------
# Fused ASPP kernel: 5 branches + bilinear upsample + concat + 1x1 head.
# One batch element per grid step; channels on sublanes, H*W on lanes.
# -----------------------------------------------------------------------------
def _aspp_fused_kernel(x_ref, w1_ref, b1_ref, w3_ref, b3_ref, w5_ref, b5_ref,
                       pm_ref, ut_ref, wh_ref, bh_ref, o_ref, xpad_ref,
                       *, H, W, pad, dilations):
    HW = H * W
    PADW = 2 * pad + HW
    C_in = x_ref.shape[0]
    bf16 = jnp.bfloat16

    def mm(a, b):                                    # MXU matmul, f32 accumulation
        return jnp.dot(a, b, preferred_element_type=jnp.float32)

    # ---- in-kernel bf16 cast + flat zero halo (no host pad / extra HBM pass) --
    zero_halo = jnp.zeros((C_in, pad), bf16)
    xpad_ref[:, 0:pad] = zero_halo
    xpad_ref[:, pad + HW:PADW] = zero_halo
    xpad_ref[:, pad:pad + HW] = x_ref[...].astype(bf16)
    xpad = xpad_ref[...]                             # (C_in, PADW) bf16
    xc = xpad[:, pad:pad + HW]                       # lane-aligned center view

    # ---- hoisted horizontal (row-edge) masks: one select per (d, +/-d) --------
    pos = jax.lax.broadcasted_iota(jnp.int32, (1, PADW), 1)
    masked = {0: xpad}                               # dx == 0 needs no mask
    for d in dilations:
        for dx in (-d, d):
            if dx in masked:
                continue
            r = (pad + dx) % W                       # Python int, keeps mod args >= 0
            colp = (pos + (W - r)) % W               # == output column index
            ok = (colp + dx >= 0) & (colp + dx < W)
            masked[dx] = jnp.where(ok, xpad, jnp.zeros_like(xpad))

    # ---- branch 1: 1x1 conv (BN folded) + ReLU --------------------------------
    a1 = jnp.maximum(mm(w1_ref[...], xc) + b1_ref[...], 0.0)
    branches = [a1]

    # ---- branches 2-4: 3x3 dilated convs, 9 taps stacked into ONE GEMM each ---
    for i, d in enumerate(dilations):
        taps = []
        for k in range(9):
            dy, dx = (k // 3 - 1) * d, (k % 3 - 1) * d
            start = pad + dy * W + dx                # static lane shift into halo
            taps.append(masked[dx][:, start:start + HW])
        rhs = jnp.concatenate(taps, axis=0)          # (9*C_in, HW) bf16
        a = jnp.maximum(mm(w3_ref[i, :, :], rhs) + b3_ref[i, :, :], 0.0)
        branches.append(a)

    # ---- branch 5: AvgPool2d(2) as GEMM, 1x1 conv + ReLU, bilinear upsample ---
    xp = mm(xc, pm_ref[...]).astype(bf16)            # (C_in, Hh*Wh)
    a5s = jnp.maximum(mm(w5_ref[...], xp) + b5_ref[...], 0.0)
    a5 = mm(a5s.astype(bf16), ut_ref[...])           # bilinear resize as one GEMM
    branches.append(a5)

    # ---- fused concat + final 1x1 conv (BN folded) + ReLU, lane-dense store ---
    cat = jnp.concatenate(branches, axis=0).astype(bf16)       # (5*C_out, HW)
    o_ref[...] = jnp.maximum(mm(wh_ref[...], cat) + bh_ref[...], 0.0)


# -----------------------------------------------------------------------------
# Wrapper
# -----------------------------------------------------------------------------
def aspp_forward(x, params, *, dilations=DILATIONS):
    """ASPP forward. x: (N, C_in, H, W) f32 NCHW -> (N, C_out, H, W) f32 NCHW."""
    N, C_in, H, W = x.shape
    assert H % 2 == 0 and W % 2 == 0, "AvgPool2d(2) front-end needs even H, W"
    HW = H * W
    Hh, Wh = H // 2, W // 2
    max_d = max(dilations)
    pad = -(-(max_d * (W + 1)) // 128) * 128         # halo >= max vertical tap shift
    assert pad >= max_d * W + max_d

    p = prep_params(params)
    C_out = p["b_head"].shape[0]
    ut = bilinear_matrix(H, W, Hh, Wh).astype(jnp.bfloat16)    # (Hh*Wh, H*W)
    pm = pool_matrix(H, W).astype(jnp.bfloat16)                # (H*W, Hh*Wh)

    x_flat = x.reshape(N, C_in, HW)                  # f32; bf16 cast happens in-kernel

    kernel = functools.partial(_aspp_fused_kernel, H=H, W=W, pad=pad,
                               dilations=dilations)
    nd = len(dilations)
    out = pl.pallas_call(
        kernel,
        out_shape=jax.ShapeDtypeStruct((N, C_out, HW), jnp.float32),
        grid_spec=pltpu.PrefetchScalarGridSpec(
            num_scalar_prefetch=0,
            grid=(N,),
            in_specs=[
                pl.BlockSpec((None, C_in, HW), lambda n: (n, 0, 0)),
                pl.BlockSpec((C_out, C_in), lambda n: (0, 0)),
                pl.BlockSpec((C_out, 1), lambda n: (0, 0)),
                pl.BlockSpec((nd, C_out, 9 * C_in), lambda n: (0, 0, 0)),
                pl.BlockSpec((nd, C_out, 1), lambda n: (0, 0, 0)),
                pl.BlockSpec((C_out, C_in), lambda n: (0, 0)),
                pl.BlockSpec((C_out, 1), lambda n: (0, 0)),
                pl.BlockSpec((HW, Hh * Wh), lambda n: (0, 0)),
                pl.BlockSpec((Hh * Wh, HW), lambda n: (0, 0)),
                pl.BlockSpec((C_out, 5 * C_out), lambda n: (0, 0)),
                pl.BlockSpec((C_out, 1), lambda n: (0, 0)),
            ],
            out_specs=pl.BlockSpec((None, C_out, HW), lambda n: (n, 0, 0)),
            scratch_shapes=[pltpu.VMEM((C_in, 2 * pad + HW), jnp.bfloat16)],
        ),
        compiler_params=pltpu.CompilerParams(
            dimension_semantics=("parallel",)),       # v7x: shard batch across TCs
    )(x_flat, p["w1"], p["b1"], p["w3"], p["b3"], p["w5"], p["b5"],
      pm, ut, p["w_head"], p["b_head"])

    return out.reshape(N, C_out, H, W)


# -----------------------------------------------------------------------------
# Precomputed spatial matrices (tiny at these resolutions)
# -----------------------------------------------------------------------------
def _interp_matrix(out_size, in_size):
    o = jnp.arange(out_size, dtype=jnp.float32)
    src = jnp.clip((o + 0.5) * (in_size / out_size) - 0.5, 0.0, in_size - 1)
    lo = jnp.floor(src).astype(jnp.int32)
    hi = jnp.minimum(lo + 1, in_size - 1)
    frac = src - lo.astype(jnp.float32)
    eye = jnp.eye(in_size, dtype=jnp.float32)
    return (1.0 - frac)[:, None] * eye[lo] + frac[:, None] * eye[hi]   # (out, in)


def bilinear_matrix(H, W, Hh, Wh):
    """(Hh*Wh, H*W) matrix UT with upsampled_flat = small_flat @ UT."""
    ry = _interp_matrix(H, Hh)
    rx = _interp_matrix(W, Wh)
    u = jnp.einsum("Yy,Xx->YXyx", ry, rx).reshape(H * W, Hh * Wh)
    return u.T


def pool_matrix(H, W):
    """(H*W, Hh*Wh) matrix P with avgpool2x2_flat = x_flat @ P."""
    Hh, Wh = H // 2, W // 2
    py = jnp.zeros((H, Hh), jnp.float32).at[jnp.arange(H), jnp.arange(H) // 2].set(0.5)
    px = jnp.zeros((W, Wh), jnp.float32).at[jnp.arange(W), jnp.arange(W) // 2].set(0.5)
    return jnp.einsum("yY,xX->yxYX", py, px).reshape(H * W, Hh * Wh)


# -----------------------------------------------------------------------------
# Synthetic parameters (PyTorch layout) + BN folding + kernel-layout prep
# -----------------------------------------------------------------------------
def init_params(key, in_channels, out_channels):
    keys = iter(jax.random.split(key, 40))

    def conv(co, ci, k):
        bound = (ci * k * k) ** -0.5
        w = jax.random.uniform(next(keys), (co, ci, k, k), jnp.float32, -bound, bound)
        b = jax.random.uniform(next(keys), (co,), jnp.float32, -bound, bound)
        return w, b

    def bn(c):
        return dict(
            gamma=jax.random.uniform(next(keys), (c,), jnp.float32, 0.5, 1.5),
            beta=0.1 * jax.random.normal(next(keys), (c,), jnp.float32),
            mean=0.1 * jax.random.normal(next(keys), (c,), jnp.float32),
            var=jax.random.uniform(next(keys), (c,), jnp.float32, 0.5, 1.5),
        )

    p = {}
    w, b = conv(out_channels, in_channels, 1)
    p["aspp1"] = dict(w=w, b=b, bn=bn(out_channels))
    for name in ("aspp2", "aspp3", "aspp4"):
        w, b = conv(out_channels, in_channels, 3)
        p[name] = dict(w=w, b=b, bn=bn(out_channels))
    w, b = conv(out_channels, in_channels, 1)
    p["aspp5"] = dict(w=w, b=b)                       # is_pool branch: no BN
    w, b = conv(out_channels, out_channels * 5, 1)
    p["head"] = dict(w=w, b=b, bn=bn(out_channels))
    return p


def _fold_bn(w, b, bn):
    scale = bn["gamma"] / jnp.sqrt(bn["var"] + BN_EPS)
    return w * scale[:, None, None, None], (b - bn["mean"]) * scale + bn["beta"]


def prep_params(params):
    """Fold eval-mode BatchNorm into convs and reshape to the kernel layout."""
    bf16 = jnp.bfloat16
    w1, b1 = _fold_bn(params["aspp1"]["w"], params["aspp1"]["b"], params["aspp1"]["bn"])
    w3s, b3s = [], []
    for name in ("aspp2", "aspp3", "aspp4"):
        w, b = _fold_bn(params[name]["w"], params[name]["b"], params[name]["bn"])
        co, ci = w.shape[0], w.shape[1]
        # (C_out, C_in, ky, kx) -> (C_out, ky, kx, C_in) -> (C_out, 9*C_in):
        # column block k = ky*3 + kx matches the in-kernel tap concat order.
        w3s.append(jnp.transpose(w, (0, 2, 3, 1)).reshape(co, 9 * ci))
        b3s.append(b)
    wh, bh = _fold_bn(params["head"]["w"], params["head"]["b"], params["head"]["bn"])
    return dict(
        w1=w1[:, :, 0, 0].astype(bf16), b1=b1[:, None],
        w3=jnp.stack(w3s).astype(bf16), b3=jnp.stack(b3s)[:, :, None],
        w5=params["aspp5"]["w"][:, :, 0, 0].astype(bf16),
        b5=params["aspp5"]["b"][:, None],
        # (C_out, 5*C_out): columns are in [x1,x2,x3,x4,x5] concat order.
        w_head=wh[:, :, 0, 0].astype(bf16), b_head=bh[:, None],
    )


# -----------------------------------------------------------------------------
# Pure-JAX f32 reference (matches the PyTorch module in eval mode)
# -----------------------------------------------------------------------------
def _bilinear_resize_nchw(x, out_h, out_w):
    n, c, h, w = x.shape

    def coords(out_size, in_size):
        o = jnp.arange(out_size, dtype=jnp.float32)
        src = jnp.clip((o + 0.5) * (in_size / out_size) - 0.5, 0.0, in_size - 1)
        lo = jnp.floor(src).astype(jnp.int32)
        hi = jnp.minimum(lo + 1, in_size - 1)
        return lo, hi, src - lo.astype(jnp.float32)

    y0, y1, fy = coords(out_h, h)
    x0, x1, fx = coords(out_w, w)
    rows = (x[:, :, y0, :] * (1.0 - fy)[None, None, :, None]
            + x[:, :, y1, :] * fy[None, None, :, None])
    return (rows[:, :, :, x0] * (1.0 - fx)[None, None, None, :]
            + rows[:, :, :, x1] * fx[None, None, None, :])


def aspp_reference(x, params, *, dilations=DILATIONS):
    N, C_in, H, W = x.shape

    def conv2d(inp, w, b, dilation=1, padding=0):
        y = jax.lax.conv_general_dilated(
            inp, w, window_strides=(1, 1),
            padding=[(padding, padding), (padding, padding)],
            rhs_dilation=(dilation, dilation),
            dimension_numbers=("NCHW", "OIHW", "NCHW"),
            precision=jax.lax.Precision.HIGHEST)
        return y + b[None, :, None, None]

    def bn_relu(y, bn):
        scale = bn["gamma"] / jnp.sqrt(bn["var"] + BN_EPS)
        y = (y - bn["mean"][None, :, None, None]) * scale[None, :, None, None]
        return jnp.maximum(y + bn["beta"][None, :, None, None], 0.0)

    branches = [bn_relu(conv2d(x, params["aspp1"]["w"], params["aspp1"]["b"]),
                        params["aspp1"]["bn"])]
    for name, d in zip(("aspp2", "aspp3", "aspp4"), dilations):
        branches.append(bn_relu(
            conv2d(x, params[name]["w"], params[name]["b"], dilation=d, padding=d),
            params[name]["bn"]))

    xp = x.reshape(N, C_in, H // 2, 2, W // 2, 2).mean(axis=(3, 5))
    x5 = jnp.maximum(conv2d(xp, params["aspp5"]["w"], params["aspp5"]["b"]), 0.0)
    x5 = _bilinear_resize_nchw(x5, H, W)

    cat = jnp.concatenate(branches + [x5], axis=1)
    return bn_relu(conv2d(cat, params["head"]["w"], params["head"]["b"]),
                   params["head"]["bn"])


# -----------------------------------------------------------------------------
if __name__ == "__main__":
    key = jax.random.PRNGKey(0)
    pkey, xkey = jax.random.split(key)

    N, in_channels, out_channels, H, W = 2, 16, 8, 16, 16
    params = init_params(pkey, in_channels, out_channels)
    x = jax.random.normal(xkey, (N, in_channels, H, W), jnp.float32)

    out = jax.block_until_ready(aspp_forward(x, params))
    assert out.shape == (N, out_channels, H, W)
    assert bool(jnp.all(jnp.isfinite(out)))

    ref = aspp_reference(x, params)
    err = float(jnp.max(jnp.abs(out - ref)))
    assert err < 5e-2, f"max abs error vs reference: {err}"
    print("KERNEL_OK")
</pallas_src>

<mosaic_0001>
module attributes {stable_mosaic.version = 11 : i64} {
  func.func @_aspp_fused_kernel(%arg0: i32, %arg1: memref<1x16x256xf32, #tpu.memory_space<vmem>>, %arg2: memref<8x16xbf16, #tpu.memory_space<vmem>>, %arg3: memref<8x1xf32, #tpu.memory_space<vmem>>, %arg4: memref<3x8x144xbf16, #tpu.memory_space<vmem>>, %arg5: memref<3x8x1xf32, #tpu.memory_space<vmem>>, %arg6: memref<8x16xbf16, #tpu.memory_space<vmem>>, %arg7: memref<8x1xf32, #tpu.memory_space<vmem>>, %arg8: memref<256x64xbf16, #tpu.memory_space<vmem>>, %arg9: memref<64x256xbf16, #tpu.memory_space<vmem>>, %arg10: memref<8x40xbf16, #tpu.memory_space<vmem>>, %arg11: memref<8x1xf32, #tpu.memory_space<vmem>>, %arg12: memref<1x8x256xf32, #tpu.memory_space<vmem>>, %arg13: memref<16x512xbf16, #tpu.memory_space<vmem>>) attributes {dimension_semantics = [#tpu.dimension_semantics<parallel>], iteration_bounds = array<i64: 2>, scalar_prefetch = 0 : i64, scratch_operands = 1 : i64, tpu.core_type = #tpu.core_type<tc>, window_params = [{transform_indices = @transform_0, window_bounds = array<i64: 1, 16, 256>}, {pipeline_mode = #tpu.pipeline_mode<synchronous>, transform_indices = @transform_1, window_bounds = array<i64: 8, 16>}, {pipeline_mode = #tpu.pipeline_mode<synchronous>, transform_indices = @transform_2, window_bounds = array<i64: 8, 1>}, {pipeline_mode = #tpu.pipeline_mode<synchronous>, transform_indices = @transform_3, window_bounds = array<i64: 3, 8, 144>}, {pipeline_mode = #tpu.pipeline_mode<synchronous>, transform_indices = @transform_4, window_bounds = array<i64: 3, 8, 1>}, {pipeline_mode = #tpu.pipeline_mode<synchronous>, transform_indices = @transform_5, window_bounds = array<i64: 8, 16>}, {pipeline_mode = #tpu.pipeline_mode<synchronous>, transform_indices = @transform_6, window_bounds = array<i64: 8, 1>}, {pipeline_mode = #tpu.pipeline_mode<synchronous>, transform_indices = @transform_7, window_bounds = array<i64: 256, 64>}, {pipeline_mode = #tpu.pipeline_mode<synchronous>, transform_indices = @transform_8, window_bounds = array<i64: 64, 256>}, {pipeline_mode = #tpu.pipeline_mode<synchronous>, transform_indices = @transform_9, window_bounds = array<i64: 8, 40>}, {pipeline_mode = #tpu.pipeline_mode<synchronous>, transform_indices = @transform_10, window_bounds = array<i64: 8, 1>}, {transform_indices = @transform_11, window_bounds = array<i64: 1, 8, 256>}]} {
    %cst = arith.constant 0.000000e+00 : bf16
    %0 = vector.broadcast %cst : bf16 to vector<16x128xbf16>
    %c0 = arith.constant 0 : index
    %c0_0 = arith.constant 0 : index
    %1 = vector.load %arg13[%c0, %c0_0] : memref<16x512xbf16, #tpu.memory_space<vmem>>, vector<16x128xbf16>
    tpu.vector_store %arg13[%c0, %c0_0], %0 {strides = array<i32>} : memref<16x512xbf16, #tpu.memory_space<vmem>>, vector<16x128xbf16>,
    %c0_1 = arith.constant 0 : index
    %c384 = arith.constant 384 : index
    %2 = vector.load %arg13[%c0_1, %c384] : memref<16x512xbf16, #tpu.memory_space<vmem>>, vector<16x128xbf16>
    tpu.vector_store %arg13[%c0_1, %c384], %0 {strides = array<i32>} : memref<16x512xbf16, #tpu.memory_space<vmem>>, vector<16x128xbf16>,
    %c0_2 = arith.constant 0 : index
    %c0_3 = arith.constant 0 : index
    %c0_4 = arith.constant 0 : index
    %3 = vector.load %arg1[%c0_2, %c0_3, %c0_4] : memref<1x16x256xf32, #tpu.memory_space<vmem>>, vector<1x16x256xf32>
    %4 = vector.shape_cast %3 : vector<1x16x256xf32> to vector<16x256xf32>
    %5 = arith.truncf %4 : vector<16x256xf32> to vector<16x256xbf16>
    %c0_5 = arith.constant 0 : index
    %c128 = arith.constant 128 : index
    %6 = vector.load %arg13[%c0_5, %c128] : memref<16x512xbf16, #tpu.memory_space<vmem>>, vector<16x256xbf16>
    tpu.vector_store %arg13[%c0_5, %c128], %5 {strides = array<i32>} : memref<16x512xbf16, #tpu.memory_space<vmem>>, vector<16x256xbf16>,
    %c0_6 = arith.constant 0 : index
    %c0_7 = arith.constant 0 : index
    %7 = vector.load %arg13[%c0_6, %c0_7] : memref<16x512xbf16, #tpu.memory_space<vmem>>, vector<16x512xbf16>
    %8 = vector.extract_strided_slice %7 {offsets = [0, 128], sizes = [16, 256], strides = [1, 1]} : vector<16x512xbf16> to vector<16x256xbf16>
    %9 = tpu.iota {dimensions = array<i32: 1>} : vector<1x512xi32>
    %c1_i32 = arith.constant 1 : i32
    %10 = vector.broadcast %c1_i32 : i32 to vector<1x512xi32>
    %11 = arith.addi %9, %10 : vector<1x512xi32>
    %c16_i32 = arith.constant 16 : i32
    %c0_i32 = arith.constant 0 : i32
    %12 = arith.cmpi eq, %c16_i32, %c0_i32 : i32
    %c1_i32_8 = arith.constant 1 : i32
    %13 = arith.select %12, %c1_i32_8, %c16_i32 : i32
    %14 = vector.broadcast %13 : i32 to vector<1x512xi32>
    %15 = arith.remsi %11, %14 : vector<1x512xi32>
    %c0_i32_9 = arith.constant 0 : i32
    %16 = vector.broadcast %c0_i32_9 : i32 to vector<1x512xi32>
    %17 = arith.cmpi ne, %15, %16 : vector<1x512xi32>
    %c0_i32_10 = arith.constant 0 : i32
    %18 = vector.broadcast %c0_i32_10 : i32 to vector<1x512xi32>
    %19 = arith.cmpi slt, %15, %18 : vector<1x512xi32>
    %c0_i32_11 = arith.constant 0 : i32
    %20 = arith.cmpi slt, %13, %c0_i32_11 : i32
    %21 = vector.broadcast %20 : i1 to vector<1x512xi1>
    %22 = vector.broadcast %21 : vector<1x512xi1> to vector<1x512xi1>
    %23 = arith.xori %19, %22 : vector<1x512xi1>
    %24 = arith.andi %23, %17 : vector<1x512xi1>
    %25 = vector.broadcast %13 : i32 to vector<1x512xi32>
    %26 = arith.addi %15, %25 : vector<1x512xi32>
    %27 = arith.select %24, %26, %15 : vector<1x512xi1>, vector<1x512xi32>
    %c-1_i32 = arith.constant -1 : i32
    %28 = vector.broadcast %c-1_i32 : i32 to vector<1x512xi32>
    %29 = arith.addi %27, %28 : vector<1x512xi32>
    %c0_i32_12 = arith.constant 0 : i32
    %30 = vector.broadcast %c0_i32_12 : i32 to vector<1x512xi32>
    %31 = arith.cmpi sge, %29, %30 : vector<1x512xi32>
    %c-1_i32_13 = arith.constant -1 : i32
    %32 = vector.broadcast %c-1_i32_13 : i32 to vector<1x512xi32>
    %33 = arith.addi %27, %32 : vector<1x512xi32>
    %c16_i32_14 = arith.constant 16 : i32
    %34 = vector.broadcast %c16_i32_14 : i32 to vector<1x512xi32>
    %35 = arith.cmpi slt, %33, %34 : vector<1x512xi32>
    %36 = arith.andi %31, %35 : vector<1x512xi1>
    %cst_15 = arith.constant 0.000000e+00 : bf16
    %37 = vector.broadcast %cst_15 : bf16 to vector<16x512xbf16>
    %38 = vector.shape_cast %36 : vector<1x512xi1> to vector<1x512xi1>
    %39 = vector.broadcast %38 : vector<1x512xi1> to vector<16x512xi1>
    %40 = arith.select %39, %7, %37 : vector<16x512xi1>, vector<16x512xbf16>
    %c15_i32 = arith.constant 15 : i32
    %41 = vector.broadcast %c15_i32 : i32 to vector<1x512xi32>
    %42 = arith.addi %9, %41 : vector<1x512xi32>
    %c16_i32_16 = arith.constant 16 : i32
    %c0_i32_17 = arith.constant 0 : i32
    %43 = arith.cmpi eq, %c16_i32_16, %c0_i32_17 : i32
    %c1_i32_18 = arith.constant 1 : i32
    %44 = arith.select %43, %c1_i32_18, %c16_i32_16 : i32
    %45 = vector.broadcast %44 : i32 to vector<1x512xi32>
    %46 = arith.remsi %42, %45 : vector<1x512xi32>
    %c0_i32_19 = arith.constant 0 : i32
    %47 = vector.broadcast %c0_i32_19 : i32 to vector<1x512xi32>
    %48 = arith.cmpi ne, %46, %47 : vector<1x512xi32>
    %c0_i32_20 = arith.constant 0 : i32
    %49 = vector.broadcast %c0_i32_20 : i32 to vector<1x512xi32>
    %50 = arith.cmpi slt, %46, %49 : vector<1x512xi32>
    %c0_i32_21 = arith.constant 0 : i32
    %51 = arith.cmpi slt, %44, %c0_i32_21 : i32
    %52 = vector.broadcast %51 : i1 to vector<1x512xi1>
    %53 = vector.broadcast %52 : vector<1x512xi1> to vector<1x512xi1>
    %54 = arith.xori %50, %53 : vector<1x512xi1>
    %55 = arith.andi %54, %48 : vector<1x512xi1>
    %56 = vector.broadcast %44 : i32 to vector<1x512xi32>
    %57 = arith.addi %46, %56 : vector<1x512xi32>
    %58 = arith.select %55, %57, %46 : vector<1x512xi1>, vector<1x512xi32>
    %c1_i32_22 = arith.constant 1 : i32
    %59 = vector.broadcast %c1_i32_22 : i32 to vector<1x512xi32>
    %60 = arith.addi %58, %59 : vector<1x512xi32>
    %c0_i32_23 = arith.constant 0 : i32
    %61 = vector.broadcast %c0_i32_23 : i32 to vector<1x512xi32>
    %62 = arith.cmpi sge, %60, %61 : vector<1x512xi32>
    %c1_i32_24 = arith.constant 1 : i32
    %63 = vector.broadcast %c1_i32_24 : i32 to vector<1x512xi32>
    %64 = arith.addi %58, %63 : vector<1x512xi32>
    %c16_i32_25 = arith.constant 16 : i32
    %65 = vector.broadcast %c16_i32_25 : i32 to vector<1x512xi32>
    %66 = arith.cmpi slt, %64, %65 : vector<1x512xi32>
    %67 = arith.andi %62, %66 : vector<1x512xi1>
    %cst_26 = arith.constant 0.000000e+00 : bf16
    %68 = vector.broadcast %cst_26 : bf16 to vector<16x512xbf16>
    %69 = vector.shape_cast %67 : vector<1x512xi1> to vector<1x512xi1>
    %70 = vector.broadcast %69 : vector<1x512xi1> to vector<16x512xi1>
    %71 = arith.select %70, %7, %68 : vector<16x512xi1>, vector<16x512xbf16>
    %c2_i32 = arith.constant 2 : i32
    %72 = vector.broadcast %c2_i32 : i32 to vector<1x512xi32>
    %73 = arith.addi %9, %72 : vector<1x512xi32>
    %c16_i32_27 = arith.constant 16 : i32
    %c0_i32_28 = arith.constant 0 : i32
    %74 = arith.cmpi eq, %c16_i32_27, %c0_i32_28 : i32
    %c1_i32_29 = arith.constant 1 : i32
    %75 = arith.select %74, %c1_i32_29, %c16_i32_27 : i32
    %76 = vector.broadcast %75 : i32 to vector<1x512xi32>
    %77 = arith.remsi %73, %76 : vector<1x512xi32>
    %c0_i32_30 = arith.constant 0 : i32
    %78 = vector.broadcast %c0_i32_30 : i32 to vector<1x512xi32>
    %79 = arith.cmpi ne, %77, %78 : vector<1x512xi32>
    %c0_i32_31 = arith.constant 0 : i32
    %80 = vector.broadcast %c0_i32_31 : i32 to vector<1x512xi32>
    %81 = arith.cmpi slt, %77, %80 : vector<1x512xi32>
    %c0_i32_32 = arith.constant 0 : i32
    %82 = arith.cmpi slt, %75, %c0_i32_32 : i32
    %83 = vector.broadcast %82 : i1 to vector<1x512xi1>
    %84 = vector.broadcast %83 : vector<1x512xi1> to vector<1x512xi1>
    %85 = arith.xori %81, %84 : vector<1x512xi1>
    %86 = arith.andi %85, %79 : vector<1x512xi1>
    %87 = vector.broadcast %75 : i32 to vector<1x512xi32>
    %88 = arith.addi %77, %87 : vector<1x512xi32>
    %89 = arith.select %86, %88, %77 : vector<1x512xi1>, vector<1x512xi32>
    %c-2_i32 = arith.constant -2 : i32
    %90 = vector.broadcast %c-2_i32 : i32 to vector<1x512xi32>
    %91 = arith.addi %89, %90 : vector<1x512xi32>
    %c0_i32_33 = arith.constant 0 : i32
    %92 = vector.broadcast %c0_i32_33 : i32 to vector<1x512xi32>
    %93 = arith.cmpi sge, %91, %92 : vector<1x512xi32>
    %c-2_i32_34 = arith.constant -2 : i32
    %94 = vector.broadcast %c-2_i32_34 : i32 to vector<1x512xi32>
    %95 = arith.addi %89, %94 : vector<1x512xi32>
    %c16_i32_35 = arith.constant 16 : i32
    %96 = vector.broadcast %c16_i32_35 : i32 to vector<1x512xi32>
    %97 = arith.cmpi slt, %95, %96 : vector<1x512xi32>
    %98 = arith.andi %93, %97 : vector<1x512xi1>
    %cst_36 = arith.constant 0.000000e+00 : bf16
    %99 = vector.broadcast %cst_36 : bf16 to vector<16x512xbf16>
    %100 = vector.shape_cast %98 : vector<1x512xi1> to vector<1x512xi1>
    %101 = vector.broadcast %100 : vector<1x512xi1> to vector<16x512xi1>
    %102 = arith.select %101, %7, %99 : vector<16x512xi1>, vector<16x512xbf16>
    %c14_i32 = arith.constant 14 : i32
    %103 = vector.broadcast %c14_i32 : i32 to vector<1x512xi32>
    %104 = arith.addi %9, %103 : vector<1x512xi32>
    %c16_i32_37 = arith.constant 16 : i32
    %c0_i32_38 = arith.constant 0 : i32
    %105 = arith.cmpi eq, %c16_i32_37, %c0_i32_38 : i32
    %c1_i32_39 = arith.constant 1 : i32
    %106 = arith.select %105, %c1_i32_39, %c16_i32_37 : i32
    %107 = vector.broadcast %106 : i32 to vector<1x512xi32>
    %108 = arith.remsi %104, %107 : vector<1x512xi32>
    %c0_i32_40 = arith.constant 0 : i32
    %109 = vector.broadcast %c0_i32_40 : i32 to vector<1x512xi32>
    %110 = arith.cmpi ne, %108, %109 : vector<1x512xi32>
    %c0_i32_41 = arith.constant 0 : i32
    %111 = vector.broadcast %c0_i32_41 : i32 to vector<1x512xi32>
    %112 = arith.cmpi slt, %108, %111 : vector<1x512xi32>
    %c0_i32_42 = arith.constant 0 : i32
    %113 = arith.cmpi slt, %106, %c0_i32_42 : i32
    %114 = vector.broadcast %113 : i1 to vector<1x512xi1>
    %115 = vector.broadcast %114 : vector<1x512xi1> to vector<1x512xi1>
    %116 = arith.xori %112, %115 : vector<1x512xi1>
    %117 = arith.andi %116, %110 : vector<1x512xi1>
    %118 = vector.broadcast %106 : i32 to vector<1x512xi32>
    %119 = arith.addi %108, %118 : vector<1x512xi32>
    %120 = arith.select %117, %119, %108 : vector<1x512xi1>, vector<1x512xi32>
    %c2_i32_43 = arith.constant 2 : i32
    %121 = vector.broadcast %c2_i32_43 : i32 to vector<1x512xi32>
    %122 = arith.addi %120, %121 : vector<1x512xi32>
    %c0_i32_44 = arith.constant 0 : i32
    %123 = vector.broadcast %c0_i32_44 : i32 to vector<1x512xi32>
    %124 = arith.cmpi sge, %122, %123 : vector<1x512xi32>
    %c2_i32_45 = arith.constant 2 : i32
    %125 = vector.broadcast %c2_i32_45 : i32 to vector<1x512xi32>
    %126 = arith.addi %120, %125 : vector<1x512xi32>
    %c16_i32_46 = arith.constant 16 : i32
    %127 = vector.broadcast %c16_i32_46 : i32 to vector<1x512xi32>
    %128 = arith.cmpi slt, %126, %127 : vector<1x512xi32>
    %129 = arith.andi %124, %128 : vector<1x512xi1>
    %cst_47 = arith.constant 0.000000e+00 : bf16
    %130 = vector.broadcast %cst_47 : bf16 to vector<16x512xbf16>
    %131 = vector.shape_cast %129 : vector<1x512xi1> to vector<1x512xi1>
    %132 = vector.broadcast %131 : vector<1x512xi1> to vector<16x512xi1>
    %133 = arith.select %132, %7, %130 : vector<16x512xi1>, vector<16x512xbf16>
    %c4_i32 = arith.constant 4 : i32
    %134 = vector.broadcast %c4_i32 : i32 to vector<1x512xi32>
    %135 = arith.addi %9, %134 : vector<1x512xi32>
    %c16_i32_48 = arith.constant 16 : i32
    %c0_i32_49 = arith.constant 0 : i32
    %136 = arith.cmpi eq, %c16_i32_48, %c0_i32_49 : i32
    %c1_i32_50 = arith.constant 1 : i32
    %137 = arith.select %136, %c1_i32_50, %c16_i32_48 : i32
    %138 = vector.broadcast %137 : i32 to vector<1x512xi32>
    %139 = arith.remsi %135, %138 : vector<1x512xi32>
    %c0_i32_51 = arith.constant 0 : i32
    %140 = vector.broadcast %c0_i32_51 : i32 to vector<1x512xi32>
    %141 = arith.cmpi ne, %139, %140 : vector<1x512xi32>
    %c0_i32_52 = arith.constant 0 : i32
    %142 = vector.broadcast %c0_i32_52 : i32 to vector<1x512xi32>
    %143 = arith.cmpi slt, %139, %142 : vector<1x512xi32>
    %c0_i32_53 = arith.constant 0 : i32
    %144 = arith.cmpi slt, %137, %c0_i32_53 : i32
    %145 = vector.broadcast %144 : i1 to vector<1x512xi1>
    %146 = vector.broadcast %145 : vector<1x512xi1> to vector<1x512xi1>
    %147 = arith.xori %143, %146 : vector<1x512xi1>
    %148 = arith.andi %147, %141 : vector<1x512xi1>
    %149 = vector.broadcast %137 : i32 to vector<1x512xi32>
    %150 = arith.addi %139, %149 : vector<1x512xi32>
    %151 = arith.select %148, %150, %139 : vector<1x512xi1>, vector<1x512xi32>
    %c-4_i32 = arith.constant -4 : i32
    %152 = vector.broadcast %c-4_i32 : i32 to vector<1x512xi32>
    %153 = arith.addi %151, %152 : vector<1x512xi32>
    %c0_i32_54 = arith.constant 0 : i32
    %154 = vector.broadcast %c0_i32_54 : i32 to vector<1x512xi32>
    %155 = arith.cmpi sge, %153, %154 : vector<1x512xi32>
    %c-4_i32_55 = arith.constant -4 : i32
    %156 = vector.broadcast %c-4_i32_55 : i32 to vector<1x512xi32>
    %157 = arith.addi %151, %156 : vector<1x512xi32>
    %c16_i32_56 = arith.constant 16 : i32
    %158 = vector.broadcast %c16_i32_56 : i32 to vector<1x512xi32>
    %159 = arith.cmpi slt, %157, %158 : vector<1x512xi32>
    %160 = arith.andi %155, %159 : vector<1x512xi1>
    %cst_57 = arith.constant 0.000000e+00 : bf16
    %161 = vector.broadcast %cst_57 : bf16 to vector<16x512xbf16>
    %162 = vector.shape_cast %160 : vector<1x512xi1> to vector<1x512xi1>
    %163 = vector.broadcast %162 : vector<1x512xi1> to vector<16x512xi1>
    %164 = arith.select %163, %7, %161 : vector<16x512xi1>, vector<16x512xbf16>
    %c12_i32 = arith.constant 12 : i32
    %165 = vector.broadcast %c12_i32 : i32 to vector<1x512xi32>
    %166 = arith.addi %9, %165 : vector<1x512xi32>
    %c16_i32_58 = arith.constant 16 : i32
    %c0_i32_59 = arith.constant 0 : i32
    %167 = arith.cmpi eq, %c16_i32_58, %c0_i32_59 : i32
    %c1_i32_60 = arith.constant 1 : i32
    %168 = arith.select %167, %c1_i32_60, %c16_i32_58 : i32
    %169 = vector.broadcast %168 : i32 to vector<1x512xi32>
    %170 = arith.remsi %166, %169 : vector<1x512xi32>
    %c0_i32_61 = arith.constant 0 : i32
    %171 = vector.broadcast %c0_i32_61 : i32 to vector<1x512xi32>
    %172 = arith.cmpi ne, %170, %171 : vector<1x512xi32>
    %c0_i32_62 = arith.constant 0 : i32
    %173 = vector.broadcast %c0_i32_62 : i32 to vector<1x512xi32>
    %174 = arith.cmpi slt, %170, %173 : vector<1x512xi32>
    %c0_i32_63 = arith.constant 0 : i32
    %175 = arith.cmpi slt, %168, %c0_i32_63 : i32
    %176 = vector.broadcast %175 : i1 to vector<1x512xi1>
    %177 = vector.broadcast %176 : vector<1x512xi1> to vector<1x512xi1>
    %178 = arith.xori %174, %177 : vector<1x512xi1>
    %179 = arith.andi %178, %172 : vector<1x512xi1>
    %180 = vector.broadcast %168 : i32 to vector<1x512xi32>
    %181 = arith.addi %170, %180 : vector<1x512xi32>
    %182 = arith.select %179, %181, %170 : vector<1x512xi1>, vector<1x512xi32>
    %c4_i32_64 = arith.constant 4 : i32
    %183 = vector.broadcast %c4_i32_64 : i32 to vector<1x512xi32>
    %184 = arith.addi %182, %183 : vector<1x512xi32>
    %c0_i32_65 = arith.constant 0 : i32
    %185 = vector.broadcast %c0_i32_65 : i32 to vector<1x512xi32>
    %186 = arith.cmpi sge, %184, %185 : vector<1x512xi32>
    %c4_i32_66 = arith.constant 4 : i32
    %187 = vector.broadcast %c4_i32_66 : i32 to vector<1x512xi32>
    %188 = arith.addi %182, %187 : vector<1x512xi32>
    %c16_i32_67 = arith.constant 16 : i32
    %189 = vector.broadcast %c16_i32_67 : i32 to vector<1x512xi32>
    %190 = arith.cmpi slt, %188, %189 : vector<1x512xi32>
    %191 = arith.andi %186, %190 : vector<1x512xi1>
    %cst_68 = arith.constant 0.000000e+00 : bf16
    %192 = vector.broadcast %cst_68 : bf16 to vector<16x512xbf16>
    %193 = vector.shape_cast %191 : vector<1x512xi1> to vector<1x512xi1>
    %194 = vector.broadcast %193 : vector<1x512xi1> to vector<16x512xi1>
    %195 = arith.select %194, %7, %192 : vector<16x512xi1>, vector<16x512xbf16>
    %c0_69 = arith.constant 0 : index
    %c0_70 = arith.constant 0 : index
    %196 = vector.load %arg2[%c0_69, %c0_70] : memref<8x16xbf16, #tpu.memory_space<vmem>>, vector<8x16xbf16>
    %cst_71 = arith.constant dense<0.000000e+00> : vector<8x256xf32>
    %197 = tpu.matmul %196, %8, %cst_71 {dimension_numbers = #tpu.dot_dimension_numbers<[1], [0], [0], [1], [0, 0, 1, 1], [], []>} : vector<8x16xbf16>, vector<16x256xbf16>, vector<8x256xf32> -> vector<8x256xf32>
    %c0_72 = arith.constant 0 : index
    %c0_73 = arith.constant 0 : index
    %198 = vector.load %arg3[%c0_72, %c0_73] : memref<8x1xf32, #tpu.memory_space<vmem>>, vector<8x1xf32>
    %199 = vector.broadcast %198 : vector<8x1xf32> to vector<8x256xf32>
    %200 = arith.addf %197, %199 : vector<8x256xf32>
    %cst_74 = arith.constant 0.000000e+00 : f32
    %201 = vector.broadcast %cst_74 : f32 to vector<8x256xf32>
    %202 = arith.maximumf %200, %201 : vector<8x256xf32>
    %203 = vector.extract_strided_slice %40 {offsets = [0, 111], sizes = [16, 256], strides = [1, 1]} : vector<16x512xbf16> to vector<16x256xbf16>
    %204 = vector.extract_strided_slice %7 {offsets = [0, 112], sizes = [16, 256], strides = [1, 1]} : vector<16x512xbf16> to vector<16x256xbf16>
    %205 = vector.extract_strided_slice %71 {offsets = [0, 113], sizes = [16, 256], strides = [1, 1]} : vector<16x512xbf16> to vector<16x256xbf16>
    %206 = vector.extract_strided_slice %40 {offsets = [0, 127], sizes = [16, 256], strides = [1, 1]} : vector<16x512xbf16> to vector<16x256xbf16>
    %207 = vector.extract_strided_slice %7 {offsets = [0, 128], sizes = [16, 256], strides = [1, 1]} : vector<16x512xbf16> to vector<16x256xbf16>
    %208 = vector.extract_strided_slice %71 {offsets = [0, 129], sizes = [16, 256], strides = [1, 1]} : vector<16x512xbf16> to vector<16x256xbf16>
    %209 = vector.extract_strided_slice %40 {offsets = [0, 143], sizes = [16, 256], strides = [1, 1]} : vector<16x512xbf16> to vector<16x256xbf16>
    %210 = vector.extract_strided_slice %7 {offsets = [0, 144], sizes = [16, 256], strides = [1, 1]} : vector<16x512xbf16> to vector<16x256xbf16>
    %211 = vector.extract_strided_slice %71 {offsets = [0, 145], sizes = [16, 256], strides = [1, 1]} : vector<16x512xbf16> to vector<16x256xbf16>
    %212 = tpu.concatenate %203, %204, %205, %206, %207, %208, %209, %210, %211 in 0 : vector<16x256xbf16>, vector<16x256xbf16>, vector<16x256xbf16>, vector<16x256xbf16>, vector<16x256xbf16>, vector<16x256xbf16>, vector<16x256xbf16>, vector<16x256xbf16>, vector<16x256xbf16> -> vector<144x256xbf16>
    %c0_75 = arith.constant 0 : index
    %c0_76 = arith.constant 0 : index
    %c0_77 = arith.constant 0 : index
    %213 = vector.load %arg4[%c0_75, %c0_76, %c0_77] : memref<3x8x144xbf16, #tpu.memory_space<vmem>>, vector<1x8x144xbf16>
    %214 = vector.shape_cast %213 : vector<1x8x144xbf16> to vector<8x144xbf16>
    %cst_78 = arith.constant dense<0.000000e+00> : vector<8x256xf32>
    %215 = tpu.matmul %214, %212, %cst_78 {dimension_numbers = #tpu.dot_dimension_numbers<[1], [0], [0], [1], [0, 0, 1, 1], [], []>} : vector<8x144xbf16>, vector<144x256xbf16>, vector<8x256xf32> -> vector<8x256xf32>
    %c0_79 = arith.constant 0 : index
    %c0_80 = arith.constant 0 : index
    %c0_81 = arith.constant 0 : index
    %216 = vector.load %arg5[%c0_79, %c0_80, %c0_81] : memref<3x8x1xf32, #tpu.memory_space<vmem>>, vector<1x8x1xf32>
    %217 = vector.shape_cast %216 : vector<1x8x1xf32> to vector<8x1xf32>
    %218 = vector.broadcast %217 : vector<8x1xf32> to vector<8x256xf32>
    %219 = arith.addf %215, %218 : vector<8x256xf32>
    %cst_82 = arith.constant 0.000000e+00 : f32
    %220 = vector.broadcast %cst_82 : f32 to vector<8x256xf32>
    %221 = arith.maximumf %219, %220 : vector<8x256xf32>
    %222 = vector.extract_strided_slice %102 {offsets = [0, 94], sizes = [16, 256], strides = [1, 1]} : vector<16x512xbf16> to vector<16x256xbf16>
    %223 = vector.extract_strided_slice %7 {offsets = [0, 96], sizes = [16, 256], strides = [1, 1]} : vector<16x512xbf16> to vector<16x256xbf16>
    %224 = vector.extract_strided_slice %133 {offsets = [0, 98], sizes = [16, 256], strides = [1, 1]} : vector<16x512xbf16> to vector<16x256xbf16>
    %225 = vector.extract_strided_slice %102 {offsets = [0, 126], sizes = [16, 256], strides = [1, 1]} : vector<16x512xbf16> to vector<16x256xbf16>
    %226 = vector.extract_strided_slice %7 {offsets = [0, 128], sizes = [16, 256], strides = [1, 1]} : vector<16x512xbf16> to vector<16x256xbf16>
    %227 = vector.extract_strided_slice %133 {offsets = [0, 130], sizes = [16, 256], strides = [1, 1]} : vector<16x512xbf16> to vector<16x256xbf16>
    %228 = vector.extract_strided_slice %102 {offsets = [0, 158], sizes = [16, 256], strides = [1, 1]} : vector<16x512xbf16> to vector<16x256xbf16>
    %229 = vector.extract_strided_slice %7 {offsets = [0, 160], sizes = [16, 256], strides = [1, 1]} : vector<16x512xbf16> to vector<16x256xbf16>
    %230 = vector.extract_strided_slice %133 {offsets = [0, 162], sizes = [16, 256], strides = [1, 1]} : vector<16x512xbf16> to vector<16x256xbf16>
    %231 = tpu.concatenate %222, %223, %224, %225, %226, %227, %228, %229, %230 in 0 : vector<16x256xbf16>, vector<16x256xbf16>, vector<16x256xbf16>, vector<16x256xbf16>, vector<16x256xbf16>, vector<16x256xbf16>, vector<16x256xbf16>, vector<16x256xbf16>, vector<16x256xbf16> -> vector<144x256xbf16>
    %c1 = arith.constant 1 : index
    %c0_83 = arith.constant 0 : index
    %c0_84 = arith.constant 0 : index
    %232 = vector.load %arg4[%c1, %c0_83, %c0_84] : memref<3x8x144xbf16, #tpu.memory_space<vmem>>, vector<1x8x144xbf16>
    %233 = vector.shape_cast %232 : vector<1x8x144xbf16> to vector<8x144xbf16>
    %cst_85 = arith.constant dense<0.000000e+00> : vector<8x256xf32>
    %234 = tpu.matmul %233, %231, %cst_85 {dimension_numbers = #tpu.dot_dimension_numbers<[1], [0], [0], [1], [0, 0, 1, 1], [], []>} : vector<8x144xbf16>, vector<144x256xbf16>, vector<8x256xf32> -> vector<8x256xf32>
    %c1_86 = arith.constant 1 : index
    %c0_87 = arith.constant 0 : index
    %c0_88 = arith.constant 0 : index
    %235 = vector.load %arg5[%c1_86, %c0_87, %c0_88] : memref<3x8x1xf32, #tpu.memory_space<vmem>>, vector<1x8x1xf32>
    %236 = vector.shape_cast %235 : vector<1x8x1xf32> to vector<8x1xf32>
    %237 = vector.broadcast %236 : vector<8x1xf32> to vector<8x256xf32>
    %238 = arith.addf %234, %237 : vector<8x256xf32>
    %cst_89 = arith.constant 0.000000e+00 : f32
    %239 = vector.broadcast %cst_89 : f32 to vector<8x256xf32>
    %240 = arith.maximumf %238, %239 : vector<8x256xf32>
    %241 = vector.extract_strided_slice %164 {offsets = [0, 60], sizes = [16, 256], strides = [1, 1]} : vector<16x512xbf16> to vector<16x256xbf16>
    %242 = vector.extract_strided_slice %7 {offsets = [0, 64], sizes = [16, 256], strides = [1, 1]} : vector<16x512xbf16> to vector<16x256xbf16>
    %243 = vector.extract_strided_slice %195 {offsets = [0, 68], sizes = [16, 256], strides = [1, 1]} : vector<16x512xbf16> to vector<16x256xbf16>
    %244 = vector.extract_strided_slice %164 {offsets = [0, 124], sizes = [16, 256], strides = [1, 1]} : vector<16x512xbf16> to vector<16x256xbf16>
    %245 = vector.extract_strided_slice %7 {offsets = [0, 128], sizes = [16, 256], strides = [1, 1]} : vector<16x512xbf16> to vector<16x256xbf16>
    %246 = vector.extract_strided_slice %195 {offsets = [0, 132], sizes = [16, 256], strides = [1, 1]} : vector<16x512xbf16> to vector<16x256xbf16>
    %247 = vector.extract_strided_slice %164 {offsets = [0, 188], sizes = [16, 256], strides = [1, 1]} : vector<16x512xbf16> to vector<16x256xbf16>
    %248 = vector.extract_strided_slice %7 {offsets = [0, 192], sizes = [16, 256], strides = [1, 1]} : vector<16x512xbf16> to vector<16x256xbf16>
    %249 = vector.extract_strided_slice %195 {offsets = [0, 196], sizes = [16, 256], strides = [1, 1]} : vector<16x512xbf16> to vector<16x256xbf16>
    %250 = tpu.concatenate %241, %242, %243, %244, %245, %246, %247, %248, %249 in 0 : vector<16x256xbf16>, vector<16x256xbf16>, vector<16x256xbf16>, vector<16x256xbf16>, vector<16x256xbf16>, vector<16x256xbf16>, vector<16x256xbf16>, vector<16x256xbf16>, vector<16x256xbf16> -> vector<144x256xbf16>
    %c2 = arith.constant 2 : index
    %c0_90 = arith.constant 0 : index
    %c0_91 = arith.constant 0 : index
    %251 = vector.load %arg4[%c2, %c0_90, %c0_91] : memref<3x8x144xbf16, #tpu.memory_space<vmem>>, vector<1x8x144xbf16>
    %252 = vector.shape_cast %251 : vector<1x8x144xbf16> to vector<8x144xbf16>
    %cst_92 = arith.constant dense<0.000000e+00> : vector<8x256xf32>
    %253 = tpu.matmul %252, %250, %cst_92 {dimension_numbers = #tpu.dot_dimension_numbers<[1], [0], [0], [1], [0, 0, 1, 1], [], []>} : vector<8x144xbf16>, vector<144x256xbf16>, vector<8x256xf32> -> vector<8x256xf32>
    %c2_93 = arith.constant 2 : index
    %c0_94 = arith.constant 0 : index
    %c0_95 = arith.constant 0 : index
    %254 = vector.load %arg5[%c2_93, %c0_94, %c0_95] : memref<3x8x1xf32, #tpu.memory_space<vmem>>, vector<1x8x1xf32>
    %255 = vector.shape_cast %254 : vector<1x8x1xf32> to vector<8x1xf32>
    %256 = vector.broadcast %255 : vector<8x1xf32> to vector<8x256xf32>
    %257 = arith.addf %253, %256 : vector<8x256xf32>
    %cst_96 = arith.constant 0.000000e+00 : f32
    %258 = vector.broadcast %cst_96 : f32 to vector<8x256xf32>
    %259 = arith.maximumf %257, %258 : vector<8x256xf32>
    %c0_97 = arith.constant 0 : index
    %c0_98 = arith.constant 0 : index
    %260 = vector.load %arg8[%c0_97, %c0_98] : memref<256x64xbf16, #tpu.memory_space<vmem>>, vector<256x64xbf16>
    %cst_99 = arith.constant dense<0.000000e+00> : vector<16x64xf32>
    %261 = tpu.matmul %8, %260, %cst_99 {dimension_numbers = #tpu.dot_dimension_numbers<[1], [0], [0], [1], [0, 0, 1, 1], [], []>} : vector<16x256xbf16>, vector<256x64xbf16>, vector<16x64xf32> -> vector<16x64xf32>
    %262 = arith.truncf %261 : vector<16x64xf32> to vector<16x64xbf16>
    %c0_100 = arith.constant 0 : index
    %c0_101 = arith.constant 0 : index
    %263 = vector.load %arg6[%c0_100, %c0_101] : memref<8x16xbf16, #tpu.memory_space<vmem>>, vector<8x16xbf16>
    %cst_102 = arith.constant dense<0.000000e+00> : vector<8x64xf32>
    %264 = tpu.matmul %263, %262, %cst_102 {dimension_numbers = #tpu.dot_dimension_numbers<[1], [0], [0], [1], [0, 0, 1, 1], [], []>} : vector<8x16xbf16>, vector<16x64xbf16>, vector<8x64xf32> -> vector<8x64xf32>
    %c0_103 = arith.constant 0 : index
    %c0_104 = arith.constant 0 : index
    %265 = vector.load %arg7[%c0_103, %c0_104] : memref<8x1xf32, #tpu.memory_space<vmem>>, vector<8x1xf32>
    %266 = vector.broadcast %265 : vector<8x1xf32> to vector<8x64xf32>
    %267 = arith.addf %264, %266 : vector<8x64xf32>
    %cst_105 = arith.constant 0.000000e+00 : f32
    %268 = vector.broadcast %cst_105 : f32 to vector<8x64xf32>
    %269 = arith.maximumf %267, %268 : vector<8x64xf32>
    %270 = arith.truncf %269 : vector<8x64xf32> to vector<8x64xbf16>
    %c0_106 = arith.constant 0 : index
    %c0_107 = arith.constant 0 : index
    %271 = vector.load %arg9[%c0_106, %c0_107] : memref<64x256xbf16, #tpu.memory_space<vmem>>, vector<64x256xbf16>
    %cst_108 = arith.constant dense<0.000000e+00> : vector<8x256xf32>
    %272 = tpu.matmul %270, %271, %cst_108 {dimension_numbers = #tpu.dot_dimension_numbers<[1], [0], [0], [1], [0, 0, 1, 1], [], []>} : vector<8x64xbf16>, vector<64x256xbf16>, vector<8x256xf32> -> vector<8x256xf32>
    %273 = tpu.concatenate %202, %221, %240, %259, %272 in 0 : vector<8x256xf32>, vector<8x256xf32>, vector<8x256xf32>, vector<8x256xf32>, vector<8x256xf32> -> vector<40x256xf32>
    %274 = arith.truncf %273 : vector<40x256xf32> to vector<40x256xbf16>
    %c0_109 = arith.constant 0 : index
    %c0_110 = arith.constant 0 : index
    %275 = vector.load %arg10[%c0_109, %c0_110] : memref<8x40xbf16, #tpu.memory_space<vmem>>, vector<8x40xbf16>
    %cst_111 = arith.constant dense<0.000000e+00> : vector<8x256xf32>
    %276 = tpu.matmul %275, %274, %cst_111 {dimension_numbers = #tpu.dot_dimension_numbers<[1], [0], [0], [1], [0, 0, 1, 1], [], []>} : vector<8x40xbf16>, vector<40x256xbf16>, vector<8x256xf32> -> vector<8x256xf32>
    %c0_112 = arith.constant 0 : index
    %c0_113 = arith.constant 0 : index
    %277 = vector.load %arg11[%c0_112, %c0_113] : memref<8x1xf32, #tpu.memory_space<vmem>>, vector<8x1xf32>
    %278 = vector.broadcast %277 : vector<8x1xf32> to vector<8x256xf32>
    %279 = arith.addf %276, %278 : vector<8x256xf32>
    %cst_114 = arith.constant 0.000000e+00 : f32
    %280 = vector.broadcast %cst_114 : f32 to vector<8x256xf32>
    %281 = arith.maximumf %279, %280 : vector<8x256xf32>
    %c0_115 = arith.constant 0 : index
    %c0_116 = arith.constant 0 : index
    %c0_117 = arith.constant 0 : index
    %282 = vector.load %arg12[%c0_115, %c0_116, %c0_117] : memref<1x8x256xf32, #tpu.memory_space<vmem>>, vector<1x8x256xf32>
    %283 = vector.shape_cast %282 : vector<1x8x256xf32> to vector<8x256xf32>
    %284 = vector.shape_cast %281 : vector<8x256xf32> to vector<1x8x256xf32>
    tpu.vector_store %arg12[%c0_115, %c0_116, %c0_117], %284 {strides = array<i32>} : memref<1x8x256xf32, #tpu.memory_space<vmem>>, vector<1x8x256xf32>,
    return
  }
  func.func @transform_0(%arg0: i32) -> (i32, i32, i32) {
    %c0_i32 = arith.constant 0 : i32
    %c0_i32_0 = arith.constant 0 : i32
    %c0_i32_1 = arith.constant 0 : i32
    return %arg0, %c0_i32, %c0_i32_0 : i32, i32, i32
  }
  func.func @transform_1(%arg0: i32) -> (i32, i32) {
    %c0_i32 = arith.constant 0 : i32
    %c0_i32_0 = arith.constant 0 : i32
    %c0_i32_1 = arith.constant 0 : i32
    return %c0_i32, %c0_i32_0 : i32, i32
  }
  func.func @transform_2(%arg0: i32) -> (i32, i32) {
    %c0_i32 = arith.constant 0 : i32
    %c0_i32_0 = arith.constant 0 : i32
    %c0_i32_1 = arith.constant 0 : i32
    return %c0_i32, %c0_i32_0 : i32, i32
  }
  func.func @transform_3(%arg0: i32) -> (i32, i32, i32) {
    %c0_i32 = arith.constant 0 : i32
    %c0_i32_0 = arith.constant 0 : i32
    %c0_i32_1 = arith.constant 0 : i32
    %c0_i32_2 = arith.constant 0 : i32
    return %c0_i32, %c0_i32_0, %c0_i32_1 : i32, i32, i32
  }
  func.func @transform_4(%arg0: i32) -> (i32, i32, i32) {
    %c0_i32 = arith.constant 0 : i32
    %c0_i32_0 = arith.constant 0 : i32
    %c0_i32_1 = arith.constant 0 : i32
    %c0_i32_2 = arith.constant 0 : i32
    return %c0_i32, %c0_i32_0, %c0_i32_1 : i32, i32, i32
  }
  func.func @transform_5(%arg0: i32) -> (i32, i32) {
    %c0_i32 = arith.constant 0 : i32
    %c0_i32_0 = arith.constant 0 : i32
    %c0_i32_1 = arith.constant 0 : i32
    return %c0_i32, %c0_i32_0 : i32, i32
  }
  func.func @transform_6(%arg0: i32) -> (i32, i32) {
    %c0_i32 = arith.constant 0 : i32
    %c0_i32_0 = arith.constant 0 : i32
    %c0_i32_1 = arith.constant 0 : i32
    return %c0_i32, %c0_i32_0 : i32, i32
  }
  func.func @transform_7(%arg0: i32) -> (i32, i32) {
    %c0_i32 = arith.constant 0 : i32
    %c0_i32_0 = arith.constant 0 : i32
    %c0_i32_1 = arith.constant 0 : i32
    return %c0_i32, %c0_i32_0 : i32, i32
  }
  func.func @transform_8(%arg0: i32) -> (i32, i32) {
    %c0_i32 = arith.constant 0 : i32
    %c0_i32_0 = arith.constant 0 : i32
    %c0_i32_1 = arith.constant 0 : i32
    return %c0_i32, %c0_i32_0 : i32, i32
  }
  func.func @transform_9(%arg0: i32) -> (i32, i32) {
    %c0_i32 = arith.constant 0 : i32
    %c0_i32_0 = arith.constant 0 : i32
    %c0_i32_1 = arith.constant 0 : i32
    return %c0_i32, %c0_i32_0 : i32, i32
  }
  func.func @transform_10(%arg0: i32) -> (i32, i32) {
    %c0_i32 = arith.constant 0 : i32
    %c0_i32_0 = arith.constant 0 : i32
    %c0_i32_1 = arith.constant 0 : i32
    return %c0_i32, %c0_i32_0 : i32, i32
  }
  func.func @transform_11(%arg0: i32) -> (i32, i32, i32) {
    %c0_i32 = arith.constant 0 : i32
    %c0_i32_0 = arith.constant 0 : i32
    %c0_i32_1 = arith.constant 0 : i32
    return %arg0, %c0_i32, %c0_i32_0 : i32, i32, i32
  }
}

</mosaic_0001>

<llo_original>
// kernel: tpu_custom_call.1
$region0: #{tpu_custom_call.1}
  #allocation0 [shape = 'u32[]', space=smem, size = 0x4, offset = 0x4, fixed_abs, tag = 'smem constant byte address 0x4 - core index']
  #allocation1 [shape = 'u32[72,128]{1,0:T(1,128)}', space=vmem, size = 0x9000, scoped, tag = 'internal scratch']
  #allocation2 [shape = 'bf16[16,512]{1,0:T(8,128)(2,1)}', space=vmem, size = 0x4000, scoped, tag = 'scratch operand']
  %s0 = inlined_call_operand.vmem [shape: f32[2,16,256], index: 0, kind: input, shape index: {}]
  %s1 = inlined_call_operand.vmem [shape: bf16[8,16], index: 1, kind: input, shape index: {}]
  %s2 = inlined_call_operand.vmem [shape: f32[8,1], index: 2, kind: input, shape index: {}]
  %s3 = inlined_call_operand.vmem [shape: bf16[3,8,144], index: 3, kind: input, shape index: {}]
  %s4 = inlined_call_operand.vmem [shape: f32[3,8,1], index: 4, kind: input, shape index: {}]
  %s5 = inlined_call_operand.vmem [shape: bf16[8,16], index: 5, kind: input, shape index: {}]
  %s6 = inlined_call_operand.vmem [shape: f32[8,1], index: 6, kind: input, shape index: {}]
  %s7 = inlined_call_operand.vmem [shape: bf16[256,64], index: 7, kind: input, shape index: {}]
  %s8 = inlined_call_operand.vmem [shape: bf16[64,256], index: 8, kind: input, shape index: {}]
  %s9 = inlined_call_operand.vmem [shape: bf16[8,40], index: 9, kind: input, shape index: {}]
  %s10 = inlined_call_operand.vmem [shape: f32[8,1], index: 10, kind: input, shape index: {}]
  %s11 = inlined_call_operand.hbm [shape: f32[2,8,256], index: 11, kind: output, shape index: {}]
  %s12 = sld [smem:[#allocation0]]
  $region77: #{tpu_custom_call.1} parent=0
    _
  %s14 = ssub.s32 1, %s12
  %s15 = scalar_select 0, %s14, %s12
  $region1: #{tpu_custom_call.1} parent=0
    #allocation3 [shape = 'u8[16384]{0}', space=vmem, size = 0x4000, scoped, tag = 'output window, operand 0']
    #allocation4 [shape = 's32[2]{0}', space=sflag, size = 0x8, scoped, tag = 'scoped memory for tpu_custom_call.1']
    %16 = vsyncpa [#allocation4], 0
    %s17 = scalar_lea.sflag [#allocation4], 1
    %18 = vsyncpa %s17, 0
    loop: start=0, step=1, limit=4
    $region2: #{tpu_custom_call.1} parent=1 // loop_pre_header
      _
    $region3: #{tpu_custom_call.1} parent=1 // loop_header
      %s20 = sphi 0, %s24
      %p21 = scmp.ge.s32.totalorder %s20, 4
      %s30 = sphi 0, %s32
      %s33 = sphi 0, %s30
      %s34 = sphi 0, %s33
      %s50 = sphi 0, %s34
      %s54 = sphi 0, %s54
      %s56 = sphi 0, %s54
      %s57 = sphi 0, %s56
      %s71 = sphi 0, %s57
      %s75 = sphi 0, %s75
      %s77 = sphi 0, %s75
      %s78 = sphi 0, %s77
      %s92 = sphi 0, %s78
      %s96 = sphi 0, %s96
      %s98 = sphi 0, %s96
      %s99 = sphi 0, %s98
      %s113 = sphi 0, %s99
      %s117 = sphi 0, %s117
      %s119 = sphi 0, %s117
      %s120 = sphi 0, %s119
      %s134 = sphi 0, %s120
      %s138 = sphi 0, %s138
      %s140 = sphi 0, %s138
      %s141 = sphi 0, %s140
      %s155 = sphi 0, %s141
      %s159 = sphi 0, %s159
      %s161 = sphi 0, %s159
      %s162 = sphi 0, %s161
      %s176 = sphi 0, %s162
      %s180 = sphi 0, %s180
      %s182 = sphi 0, %s180
      %s183 = sphi 0, %s182
      %s197 = sphi 0, %s183
      %s201 = sphi 0, %s201
      %s203 = sphi 0, %s201
      %s204 = sphi 0, %s203
      %s218 = sphi 0, %s204
      %s222 = sphi 0, %s222
      %s224 = sphi 0, %s222
      %s225 = sphi 0, %s224
      %s239 = sphi 0, %s225
      %s243 = sphi 0, %s243
      %s245 = sphi 0, %s243
      %s246 = sphi 0, %s245
      %s260 = sphi 0, %s246
      %s266 = sphi 0, %s268
      %s269 = sphi 0, %s266
      %s270 = sphi 0, %s269
      %s286 = sphi 0, %s270
    $region4: #{tpu_custom_call.1} parent=1 // loop_header_branch
      %23 = sbr.rel (%p21) target = $region8
    $region5: #{tpu_custom_call.1} parent=1 // loop_body
      %s25 = ssub.s32 %s20, 1
      %s26 = ssub.s32 %s20, 2
      %s27 = sadd.s32 %s20, 1
      %s28 = ssub.s32 %s20, %s27
      %p29 = scmp.eq.s32.totalorder %s28, 0
      %s31 = sadd.s32 %s30, 1
      %s32 = scalar_select %p29, %s30, %s31
      %p35 = pneg %p29
      %p36 = scmp.eq.s32.totalorder %s20, 1
      %p37 = por %p35, %p36
      %p38 = scmp.ne.s32.totalorder %s30, %s33
      %p39 = scmp.eq.s32.totalorder %s20, 0
      %p40 = por %p38, %p39
      %p41 = scmp.ne.s32.totalorder %s30, %s33
      %p42 = scmp.eq.s32.totalorder %s25, 1
      %p43 = por %p41, %p42
      %p44 = scmp.ne.s32.totalorder %s33, %s34
      %p45 = scmp.eq.s32.totalorder %s25, 0
      %p46 = por %p44, %p45
      %p47 = scmp.ne.s32.totalorder %s33, %s34
      %p48 = scmp.eq.s32.totalorder %s26, 1
      %p49 = por %p47, %p48
      %p51 = scmp.ne.s32.totalorder %s34, %s50
      %p52 = scmp.eq.s32.totalorder %s26, 0
      %p53 = por %p51, %p52
      %s55 = sadd.s32 %s54, 1
      %p58 = scmp.eq.s32.totalorder %s20, 1
      %p59 = scmp.ne.s32.totalorder %s54, %s56
      %p60 = scmp.eq.s32.totalorder %s20, 0
      %p61 = por %p59, %p60
      %p62 = scmp.ne.s32.totalorder %s54, %s56
      %p63 = scmp.eq.s32.totalorder %s25, 1
      %p64 = por %p62, %p63
      %p65 = scmp.ne.s32.totalorder %s56, %s57
      %p66 = scmp.eq.s32.totalorder %s25, 0
      %p67 = por %p65, %p66
      %p68 = scmp.ne.s32.totalorder %s56, %s57
      %p69 = scmp.eq.s32.totalorder %s26, 1
      %p70 = por %p68, %p69
      %p72 = scmp.ne.s32.totalorder %s57, %s71
      %p73 = scmp.eq.s32.totalorder %s26, 0
      %p74 = por %p72, %p73
      %s76 = sadd.s32 %s75, 1
      %p79 = scmp.eq.s32.totalorder %s20, 1
      %p80 = scmp.ne.s32.totalorder %s75, %s77
      %p81 = scmp.eq.s32.totalorder %s20, 0
      %p82 = por %p80, %p81
      %p83 = scmp.ne.s32.totalorder %s75, %s77
      %p84 = scmp.eq.s32.totalorder %s25, 1
      %p85 = por %p83, %p84
      %p86 = scmp.ne.s32.totalorder %s77, %s78
      %p87 = scmp.eq.s32.totalorder %s25, 0
      %p88 = por %p86, %p87
      %p89 = scmp.ne.s32.totalorder %s77, %s78
      %p90 = scmp.eq.s32.totalorder %s26, 1
      %p91 = por %p89, %p90
      %p93 = scmp.ne.s32.totalorder %s78, %s92
      %p94 = scmp.eq.s32.totalorder %s26, 0
      %p95 = por %p93, %p94
      %s97 = sadd.s32 %s96, 1
      %p100 = scmp.eq.s32.totalorder %s20, 1
      %p101 = scmp.ne.s32.totalorder %s96, %s98
      %p102 = scmp.eq.s32.totalorder %s20, 0
      %p103 = por %p101, %p102
      %p104 = scmp.ne.s32.totalorder %s96, %s98
      %p105 = scmp.eq.s32.totalorder %s25, 1
      %p106 = por %p104, %p105
      %p107 = scmp.ne.s32.totalorder %s98, %s99
      %p108 = scmp.eq.s32.totalorder %s25, 0
      %p109 = por %p107, %p108
      %p110 = scmp.ne.s32.totalorder %s98, %s99
      %p111 = scmp.eq.s32.totalorder %s26, 1
      %p112 = por %p110, %p111
      %p114 = scmp.ne.s32.totalorder %s99, %s113
      %p115 = scmp.eq.s32.totalorder %s26, 0
      %p116 = por %p114, %p115
      %s118 = sadd.s32 %s117, 1
      %p121 = scmp.eq.s32.totalorder %s20, 1
      %p122 = scmp.ne.s32.totalorder %s117, %s119
      %p123 = scmp.eq.s32.totalorder %s20, 0
      %p124 = por %p122, %p123
      %p125 = scmp.ne.s32.totalorder %s117, %s119
      %p126 = scmp.eq.s32.totalorder %s25, 1
      %p127 = por %p125, %p126
      %p128 = scmp.ne.s32.totalorder %s119, %s120
      %p129 = scmp.eq.s32.totalorder %s25, 0
      %p130 = por %p128, %p129
      %p131 = scmp.ne.s32.totalorder %s119, %s120
      %p132 = scmp.eq.s32.totalorder %s26, 1
      %p133 = por %p131, %p132
      %p135 = scmp.ne.s32.totalorder %s120, %s134
      %p136 = scmp.eq.s32.totalorder %s26, 0
      %p137 = por %p135, %p136
      %s139 = sadd.s32 %s138, 1
      %p142 = scmp.eq.s32.totalorder %s20, 1
      %p143 = scmp.ne.s32.totalorder %s138, %s140
      %p144 = scmp.eq.s32.totalorder %s20, 0
      %p145 = por %p143, %p144
      %p146 = scmp.ne.s32.totalorder %s138, %s140
      %p147 = scmp.eq.s32.totalorder %s25, 1
      %p148 = por %p146, %p147
      %p149 = scmp.ne.s32.totalorder %s140, %s141
      %p150 = scmp.eq.s32.totalorder %s25, 0
      %p151 = por %p149, %p150
      %p152 = scmp.ne.s32.totalorder %s140, %s141
      %p153 = scmp.eq.s32.totalorder %s26, 1
      %p154 = por %p152, %p153
      %p156 = scmp.ne.s32.totalorder %s141, %s155
      %p157 = scmp.eq.s32.totalorder %s26, 0
      %p158 = por %p156, %p157
      %s160 = sadd.s32 %s159, 1
      %p163 = scmp.eq.s32.totalorder %s20, 1
      %p164 = scmp.ne.s32.totalorder %s159, %s161
      %p165 = scmp.eq.s32.totalorder %s20, 0
      %p166 = por %p164, %p165
      %p167 = scmp.ne.s32.totalorder %s159, %s161
      %p168 = scmp.eq.s32.totalorder %s25, 1
      %p169 = por %p167, %p168
      %p170 = scmp.ne.s32.totalorder %s161, %s162
      %p171 = scmp.eq.s32.totalorder %s25, 0
      %p172 = por %p170, %p171
      %p173 = scmp.ne.s32.totalorder %s161, %s162
      %p174 = scmp.eq.s32.totalorder %s26, 1
      %p175 = por %p173, %p174
      %p177 = scmp.ne.s32.totalorder %s162, %s176
      %p178 = scmp.eq.s32.totalorder %s26, 0
      %p179 = por %p177, %p178
      %s181 = sadd.s32 %s180, 1
      %p184 = scmp.eq.s32.totalorder %s20, 1
      %p185 = scmp.ne.s32.totalorder %s180, %s182
      %p186 = scmp.eq.s32.totalorder %s20, 0
      %p187 = por %p185, %p186
      %p188 = scmp.ne.s32.totalorder %s180, %s182
      %p189 = scmp.eq.s32.totalorder %s25, 1
      %p190 = por %p188, %p189
      %p191 = scmp.ne.s32.totalorder %s182, %s183
      %p192 = scmp.eq.s32.totalorder %s25, 0
      %p193 = por %p191, %p192
      %p194 = scmp.ne.s32.totalorder %s182, %s183
      %p195 = scmp.eq.s32.totalorder %s26, 1
      %p196 = por %p194, %p195
      %p198 = scmp.ne.s32.totalorder %s183, %s197
      %p199 = scmp.eq.s32.totalorder %s26, 0
      %p200 = por %p198, %p199
      %s202 = sadd.s32 %s201, 1
      %p205 = scmp.eq.s32.totalorder %s20, 1
      %p206 = scmp.ne.s32.totalorder %s201, %s203
      %p207 = scmp.eq.s32.totalorder %s20, 0
      %p208 = por %p206, %p207
      %p209 = scmp.ne.s32.totalorder %s201, %s203
      %p210 = scmp.eq.s32.totalorder %s25, 1
      %p211 = por %p209, %p210
      %p212 = scmp.ne.s32.totalorder %s203, %s204
      %p213 = scmp.eq.s32.totalorder %s25, 0
      %p214 = por %p212, %p213
      %p215 = scmp.ne.s32.totalorder %s203, %s204
      %p216 = scmp.eq.s32.totalorder %s26, 1
      %p217 = por %p215, %p216
      %p219 = scmp.ne.s32.totalorder %s204, %s218
      %p220 = scmp.eq.s32.totalorder %s26, 0
      %p221 = por %p219, %p220
      %s223 = sadd.s32 %s222, 1
      %p226 = scmp.eq.s32.totalorder %s20, 1
      %p227 = scmp.ne.s32.totalorder %s222, %s224
      %p228 = scmp.eq.s32.totalorder %s20, 0
      %p229 = por %p227, %p228
      %p230 = scmp.ne.s32.totalorder %s222, %s224
      %p231 = scmp.eq.s32.totalorder %s25, 1
      %p232 = por %p230, %p231
      %p233 = scmp.ne.s32.totalorder %s224, %s225
      %p234 = scmp.eq.s32.totalorder %s25, 0
      %p235 = por %p233, %p234
      %p236 = scmp.ne.s32.totalorder %s224, %s225
      %p237 = scmp.eq.s32.totalorder %s26, 1
      %p238 = por %p236, %p237
      %p240 = scmp.ne.s32.totalorder %s225, %s239
      %p241 = scmp.eq.s32.totalorder %s26, 0
      %p242 = por %p240, %p241
      %s244 = sadd.s32 %s243, 1
      %p247 = scmp.eq.s32.totalorder %s20, 1
      %p248 = scmp.ne.s32.totalorder %s243, %s245
      %p249 = scmp.eq.s32.totalorder %s20, 0
      %p250 = por %p248, %p249
      %p251 = scmp.ne.s32.totalorder %s243, %s245
      %p252 = scmp.eq.s32.totalorder %s25, 1
      %p253 = por %p251, %p252
      %p254 = scmp.ne.s32.totalorder %s245, %s246
      %p255 = scmp.eq.s32.totalorder %s25, 0
      %p256 = por %p254, %p255
      %p257 = scmp.ne.s32.totalorder %s245, %s246
      %p258 = scmp.eq.s32.totalorder %s26, 1
      %p259 = por %p257, %p258
      %p261 = scmp.ne.s32.totalorder %s246, %s260
      %p262 = scmp.eq.s32.totalorder %s26, 0
      %p263 = por %p261, %p262
      %s264 = ssub.s32 %s20, %s27
      %p265 = scmp.eq.s32.totalorder %s264, 0
      %s267 = sadd.s32 %s266, 1
      %s268 = scalar_select %p265, %s266, %s267
      %p271 = pneg %p265
      %p272 = scmp.eq.s32.totalorder %s20, 1
      %p273 = por %p271, %p272
      %p274 = scmp.ne.s32.totalorder %s266, %s269
      %p275 = scmp.eq.s32.totalorder %s20, 0
      %p276 = por %p274, %p275
      %p277 = scmp.ne.s32.totalorder %s266, %s269
      %p278 = scmp.eq.s32.totalorder %s25, 1
      %p279 = por %p277, %p278
      %p280 = scmp.ne.s32.totalorder %s269, %s270
      %p281 = scmp.eq.s32.totalorder %s25, 0
      %p282 = por %p280, %p281
      %p283 = scmp.ne.s32.totalorder %s269, %s270
      %p284 = scmp.eq.s32.totalorder %s26, 1
      %p285 = por %p283, %p284
      %p287 = scmp.ne.s32.totalorder %s270, %s286
      %p288 = scmp.eq.s32.totalorder %s26, 0
      %p289 = por %p287, %p288
      %p290 = scmp.le.s32.totalorder 1, %s20
      %p291 = scmp.lt.s32.totalorder %s20, 3
      %p292 = pnand %p290, %p291
      %p293 = pneg %p292
      // Predicated region
      $region9: #{tpu_custom_call.1} parent=5 // pred_check
        _
      $region10: #{tpu_custom_call.1} parent=5 // pred_check_branch
        %295 = sbr.rel (%p292) target = $region12
      $region11: #{tpu_custom_call.1} parent=5 // pred_region
        %s296 = ssub.s32 %s20, 1
        // Predicated region
        $region13: #{tpu_custom_call.1} parent=11 // pred_check
          %p297 = pneg %p67
        $region14: #{tpu_custom_call.1} parent=11 // pred_check_branch
          %299 = sbr.rel (%p297) target = $region16
        $region15: #{tpu_custom_call.1} parent=11 // pred_region
          _
        $region16: #{tpu_custom_call.1} parent=11 // pred_fallthru
          _
        // Predicated region
        $region17: #{tpu_custom_call.1} parent=11 // pred_check
          %p300 = pneg %p88
        $region18: #{tpu_custom_call.1} parent=11 // pred_check_branch
          %302 = sbr.rel (%p300) target = $region20
        $region19: #{tpu_custom_call.1} parent=11 // pred_region
          _
        $region20: #{tpu_custom_call.1} parent=11 // pred_fallthru
          _
        // Predicated region
        $region21: #{tpu_custom_call.1} parent=11 // pred_check
          %p303 = pneg %p109
        $region22: #{tpu_custom_call.1} parent=11 // pred_check_branch
          %305 = sbr.rel (%p303) target = $region24
        $region23: #{tpu_custom_call.1} parent=11 // pred_region
          _
        $region24: #{tpu_custom_call.1} parent=11 // pred_fallthru
          _
        // Predicated region
        $region25: #{tpu_custom_call.1} parent=11 // pred_check
          %p306 = pneg %p130
        $region26: #{tpu_custom_call.1} parent=11 // pred_check_branch
          %308 = sbr.rel (%p306) target = $region28
        $region27: #{tpu_custom_call.1} parent=11 // pred_region
          _
        $region28: #{tpu_custom_call.1} parent=11 // pred_fallthru
          _
        // Predicated region
        $region29: #{tpu_custom_call.1} parent=11 // pred_check
          %p309 = pneg %p151
        $region30: #{tpu_custom_call.1} parent=11 // pred_check_branch
          %311 = sbr.rel (%p309) target = $region32
        $region31: #{tpu_custom_call.1} parent=11 // pred_region
          _
        $region32: #{tpu_custom_call.1} parent=11 // pred_fallthru
          _
        // Predicated region
        $region33: #{tpu_custom_call.1} parent=11 // pred_check
          %p312 = pneg %p172
        $region34: #{tpu_custom_call.1} parent=11 // pred_check_branch
          %314 = sbr.rel (%p312) target = $region36
        $region35: #{tpu_custom_call.1} parent=11 // pred_region
          _
        $region36: #{tpu_custom_call.1} parent=11 // pred_fallthru
          _
        // Predicated region
        $region37: #{tpu_custom_call.1} parent=11 // pred_check
          %p315 = pneg %p193
        $region38: #{tpu_custom_call.1} parent=11 // pred_check_branch
          %317 = sbr.rel (%p315) target = $region40
        $region39: #{tpu_custom_call.1} parent=11 // pred_region
          _
        $region40: #{tpu_custom_call.1} parent=11 // pred_fallthru
          _
        // Predicated region
        $region41: #{tpu_custom_call.1} parent=11 // pred_check
          %p318 = pneg %p214
        $region42: #{tpu_custom_call.1} parent=11 // pred_check_branch
          %320 = sbr.rel (%p318) target = $region44
        $region43: #{tpu_custom_call.1} parent=11 // pred_region
          _
        $region44: #{tpu_custom_call.1} parent=11 // pred_fallthru
          _
        // Predicated region
        $region45: #{tpu_custom_call.1} parent=11 // pred_check
          %p321 = pneg %p235
        $region46: #{tpu_custom_call.1} parent=11 // pred_check_branch
          %323 = sbr.rel (%p321) target = $region48
        $region47: #{tpu_custom_call.1} parent=11 // pred_region
          _
        $region48: #{tpu_custom_call.1} parent=11 // pred_fallthru
          _
        // Predicated region
        $region49: #{tpu_custom_call.1} parent=11 // pred_check
          %p324 = pneg %p256
        $region50: #{tpu_custom_call.1} parent=11 // pred_check_branch
          %326 = sbr.rel (%p324) target = $region52
        $region51: #{tpu_custom_call.1} parent=11 // pred_region
          _
        $region52: #{tpu_custom_call.1} parent=11 // pred_fallthru
          _
      $region12: #{tpu_custom_call.1} parent=5 // pred_fallthru
        _
      %p327 = scmp.lt.s32.totalorder %s20, 2
      // Predicated region
      $region53: #{tpu_custom_call.1} parent=5 // pred_check
        %p328 = pneg %p327
      $region54: #{tpu_custom_call.1} parent=5 // pred_check_branch
        %330 = sbr.rel (%p328) target = $region56
      $region55: #{tpu_custom_call.1} parent=5 // pred_region
        // Predicated region
        $region57: #{tpu_custom_call.1} parent=55 // pred_check
          %p331 = pneg %p40
        $region58: #{tpu_custom_call.1} parent=55 // pred_check_branch
          %333 = sbr.rel (%p331) target = $region60
        $region59: #{tpu_custom_call.1} parent=55 // pred_region
          %p334 = scmp.lt.s32.totalorder %s20, 1
          %s335 = scalar_select %p334, %s20, 1
          %s336 = smul.addr %s335, 4
          %s337 = smul.addr %s336, 8
          %s338 = scalar_lea.vmem %s0, %s337
        $region60: #{tpu_custom_call.1} parent=55 // pred_fallthru
          _
      $region56: #{tpu_custom_call.1} parent=5 // pred_fallthru
        _
      %p339 = scmp.le.s32.totalorder 1, %s20
      %p340 = scmp.lt.s32.totalorder %s20, 3
      %p341 = pnand %p339, %p340
      %p342 = pneg %p341
      // Predicated region
      $region61: #{tpu_custom_call.1} parent=5 // pred_check
        _
      $region62: #{tpu_custom_call.1} parent=5 // pred_check_branch
        %344 = sbr.rel (%p341) target = $region64
      $region63: #{tpu_custom_call.1} parent=5 // pred_region
        %s345 = ssub.s32 %s20, 1
        %p346 = scmp.lt.s32.totalorder %s25, 1
        %s347 = scalar_select %p346, %s25, 1
        %s348 = smul.addr %s347, 4
        %s349 = smul.addr %s348, 8
        %s350 = scalar_lea.vmem %s0, %s349
        %p351 = pneg %p46
        %p352 = pneg %p43
        %p353 = pneg %p67
        %p354 = pneg %p64
        %p355 = pneg %p88
        %p356 = pneg %p85
        %p357 = pneg %p109
        %p358 = pneg %p106
        %p359 = pneg %p130
        %p360 = pneg %p127
        %p361 = pneg %p151
        %p362 = pneg %p148
        %p363 = pneg %p172
        %p364 = pneg %p169
        %p365 = pneg %p193
        %p366 = pneg %p190
        %p367 = pneg %p214
        %p368 = pneg %p211
        %p369 = pneg %p235
        %p370 = pneg %p232
        %p371 = pneg %p256
        %p372 = pneg %p253
        %p373 = pneg %p282
        %p374 = pneg %p279
        %s375 = sand.u32 %s269, 1
        %s376 = scalar_lea.sflag [#allocation4], %s375
        %s377 = sand.u32 %s269, 1
        %s378 = smul.addr %s377, 16
        %s379 = scalar_lea.vmem [#allocation3], %s378
        %p380 = scmp.lt.s32.totalorder %s25, 1
        %s381 = scalar_select %p380, %s25, 1
        %s382 = smul.addr %s381, 4
        %s383 = smul.addr %s382, 8
        %s384 = scalar_lea.vmem %s0, %s383
        %386 = vst [vmem:[#allocation2] sm:$0xf] 0
        %387 = vst [vmem:[#allocation2 + $0x10] sm:$0xf] 0
        %388 = vst [vmem:[#allocation2 + $0xc] sm:$0xf] 0
        %389 = vst [vmem:[#allocation2 + $0x1c] sm:$0xf] 0
        %v390 = vld [vmem:[%s384] sm:$0xff]
        %v391 = vld [vmem:[%s384 + $0x8] sm:$0xff]
        %v392 = vld [vmem:[%s384 + $0x10] sm:$0xff]
        %v393 = vld [vmem:[%s384 + $0x18] sm:$0xff]
        %v394 = vpack.c.bf16 %v391, %v390
        %v395 = vpack.c.bf16 %v393, %v392
        %396 = vst [vmem:[#allocation2 + $0x4] sm:$0xff] %v394
        %397 = vst [vmem:[#allocation2 + $0x14] sm:$0xff] %v395
        %v398 = vld [vmem:[#allocation2] sm:$0xff]
        %v399 = vld [vmem:[#allocation2 + $0x8] sm:$0xff]
        %v400 = vld [vmem:[#allocation2 + $0x10] sm:$0xff]
        %v401 = vld [vmem:[#allocation2 + $0x18] sm:$0xff]
        %v402 = vlaneseq
        %v403 = vand.u32 %v402, 127
        %v404 = vadd.s32 %v403, 128
        %v405 = vadd.s32 %v403, 256
        %v406 = vadd.s32 %v403, 384
        %v407 = vadd.s32 %v403, 1
        %v408 = vadd.s32 %v404, 1
        %v409 = vadd.s32 %v405, 1
        %v410 = vadd.s32 %v406, 1
        %vm411 = vcmp.lt.s32.totalorder %v407, 0
        %v412 = vsub.s32 0, %v407
        %v413 = vsel %vm411, %v412, %v407
        %v414 = vshrl.u32 %v413, 4
        %v415 = vand.u32 %v413, 15
        %v416 = vsub.s32 0, %v415
        %v417 = vsel %vm411, %v416, %v415
        %vm418 = vcmp.lt.s32.totalorder %v408, 0
        %v419 = vsub.s32 0, %v408
        %v420 = vsel %vm418, %v419, %v408
        %v421 = vshrl.u32 %v420, 4
        %v422 = vand.u32 %v420, 15
        %v423 = vsub.s32 0, %v422
        %v424 = vsel %vm418, %v423, %v422
        %vm425 = vcmp.lt.s32.totalorder %v409, 0
        %v426 = vsub.s32 0, %v409
        %v427 = vsel %vm425, %v426, %v409
        %v428 = vshrl.u32 %v427, 4
        %v429 = vand.u32 %v427, 15
        %v430 = vsub.s32 0, %v429
        %v431 = vsel %vm425, %v430, %v429
        %vm432 = vcmp.lt.s32.totalorder %v410, 0
        %v433 = vsub.s32 0, %v410
        %v434 = vsel %vm432, %v433, %v410
        %v435 = vshrl.u32 %v434, 4
        %v436 = vand.u32 %v434, 15
        %v437 = vsub.s32 0, %v436
        %v438 = vsel %vm432, %v437, %v436
        %vm439 = vcmp.ne.s32.totalorder %v417, 0
        %vm440 = vcmp.ne.s32.totalorder %v424, 0
        %vm441 = vcmp.ne.s32.totalorder %v431, 0
        %vm442 = vcmp.ne.s32.totalorder %v438, 0
        %vm443 = vcmp.lt.s32.totalorder %v417, 0
        %vm444 = vcmp.lt.s32.totalorder %v424, 0
        %vm445 = vcmp.lt.s32.totalorder %v431, 0
        %vm446 = vcmp.lt.s32.totalorder %v438, 0
        %vm447 = vmand %vm443, %vm439
        %vm448 = vmand %vm444, %vm440
        %vm449 = vmand %vm445, %vm441
        %vm450 = vmand %vm446, %vm442
        %v451 = vadd.s32 %v417, 16
        %v452 = vadd.s32 %v424, 16
        %v453 = vadd.s32 %v431, 16
        %v454 = vadd.s32 %v438, 16
        %v455 = vsel %vm447, %v451, %v417
        %v456 = vsel %vm448, %v452, %v424
        %v457 = vsel %vm449, %v453, %v431
        %v458 = vsel %vm450, %v454, %v438
        %v459 = vadd.s32 %v455, 4294967295
        %v460 = vadd.s32 %v456, 4294967295
        %v461 = vadd.s32 %v457, 4294967295
        %v462 = vadd.s32 %v458, 4294967295
        %vm463 = vcmp.ge.s32.totalorder %v459, 0
        %vm464 = vcmp.ge.s32.totalorder %v460, 0
        %vm465 = vcmp.ge.s32.totalorder %v461, 0
        %vm466 = vcmp.ge.s32.totalorder %v462, 0
        %vm467 = vcmp.lt.s32.totalorder %v459, 16
        %vm468 = vcmp.lt.s32.totalorder %v460, 16
        %vm469 = vcmp.lt.s32.totalorder %v461, 16
        %vm470 = vcmp.lt.s32.totalorder %v462, 16
        %vm471 = vmand %vm463, %vm467
        %vm472 = vmand %vm464, %vm468
        %vm473 = vmand %vm465, %vm469
        %vm474 = vmand %vm466, %vm470
        %v475 = vsel %vm471, 1, 0
        %v476 = vsel %vm472, 1, 0
        %v477 = vsel %vm473, 1, 0
        %v478 = vsel %vm474, 1, 0
        %vm479 = vcmp.eq.s32.totalorder %v475, 1
        %vm480 = vcmp.eq.s32.totalorder %v476, 1
        %vm481 = vcmp.eq.s32.totalorder %v477, 1
        %vm482 = vcmp.eq.s32.totalorder %v478, 1
        %vm483 = vmpackc.low %vm480, %vm479
        %vm484 = vmpackc.low %vm482, %vm481
        %v485 = vsel %vm483, %v398, 0
        %v486 = vsel %vm484, %v399, 0
        %v487 = vsel %vm483, %v400, 0
        %v488 = vsel %vm484, %v401, 0
        %v489 = vadd.s32 %v403, 15
        %v490 = vadd.s32 %v404, 15
        %v491 = vadd.s32 %v405, 15
        %v492 = vadd.s32 %v406, 15
        %vm493 = vcmp.lt.s32.totalorder %v489, 0
        %v494 = vsub.s32 0, %v489
        %v495 = vsel %vm493, %v494, %v489
        %v496 = vshrl.u32 %v495, 4
        %v497 = vand.u32 %v495, 15
        %v498 = vsub.s32 0, %v497
        %v499 = vsel %vm493, %v498, %v497
        %vm500 = vcmp.lt.s32.totalorder %v490, 0
        %v501 = vsub.s32 0, %v490
        %v502 = vsel %vm500, %v501, %v490
        %v503 = vshrl.u32 %v502, 4
        %v504 = vand.u32 %v502, 15
        %v505 = vsub.s32 0, %v504
        %v506 = vsel %vm500, %v505, %v504
        %vm507 = vcmp.lt.s32.totalorder %v491, 0
        %v508 = vsub.s32 0, %v491
        %v509 = vsel %vm507, %v508, %v491
        %v510 = vshrl.u32 %v509, 4
        %v511 = vand.u32 %v509, 15
        %v512 = vsub.s32 0, %v511
        %v513 = vsel %vm507, %v512, %v511
        %vm514 = vcmp.lt.s32.totalorder %v492, 0
        %v515 = vsub.s32 0, %v492
        %v516 = vsel %vm514, %v515, %v492
        %v517 = vshrl.u32 %v516, 4
        %v518 = vand.u32 %v516, 15
        %v519 = vsub.s32 0, %v518
        %v520 = vsel %vm514, %v519, %v518
        %vm521 = vcmp.ne.s32.totalorder %v499, 0
        %vm522 = vcmp.ne.s32.totalorder %v506, 0
        %vm523 = vcmp.ne.s32.totalorder %v513, 0
        %vm524 = vcmp.ne.s32.totalorder %v520, 0
        %vm525 = vcmp.lt.s32.totalorder %v499, 0
        %vm526 = vcmp.lt.s32.totalorder %v506, 0
        %vm527 = vcmp.lt.s32.totalorder %v513, 0
        %vm528 = vcmp.lt.s32.totalorder %v520, 0
        %vm529 = vmand %vm525, %vm521
        %vm530 = vmand %vm526, %vm522
        %vm531 = vmand %vm527, %vm523
        %vm532 = vmand %vm528, %vm524
        %v533 = vadd.s32 %v499, 16
        %v534 = vadd.s32 %v506, 16
        %v535 = vadd.s32 %v513, 16
        %v536 = vadd.s32 %v520, 16
        %v537 = vsel %vm529, %v533, %v499
        %v538 = vsel %vm530, %v534, %v506
        %v539 = vsel %vm531, %v535, %v513
        %v540 = vsel %vm532, %v536, %v520
        %v541 = vadd.s32 %v537, 1
        %v542 = vadd.s32 %v538, 1
        %v543 = vadd.s32 %v539, 1
        %v544 = vadd.s32 %v540, 1
        %vm545 = vcmp.ge.s32.totalorder %v541, 0
        %vm546 = vcmp.ge.s32.totalorder %v542, 0
        %vm547 = vcmp.ge.s32.totalorder %v543, 0
        %vm548 = vcmp.ge.s32.totalorder %v544, 0
        %vm549 = vcmp.lt.s32.totalorder %v541, 16
        %vm550 = vcmp.lt.s32.totalorder %v542, 16
        %vm551 = vcmp.lt.s32.totalorder %v543, 16
        %vm552 = vcmp.lt.s32.totalorder %v544, 16
        %vm553 = vmand %vm545, %vm549
        %vm554 = vmand %vm546, %vm550
        %vm555 = vmand %vm547, %vm551
        %vm556 = vmand %vm548, %vm552
        %v557 = vsel %vm553, 1, 0
        %v558 = vsel %vm554, 1, 0
        %v559 = vsel %vm555, 1, 0
        %v560 = vsel %vm556, 1, 0
        %vm561 = vcmp.eq.s32.totalorder %v557, 1
        %vm562 = vcmp.eq.s32.totalorder %v558, 1
        %vm563 = vcmp.eq.s32.totalorder %v559, 1
        %vm564 = vcmp.eq.s32.totalorder %v560, 1
        %vm565 = vmpackc.low %vm562, %vm561
        %vm566 = vmpackc.low %vm564, %vm563
        %v567 = vsel %vm565, %v398, 0
        %v568 = vsel %vm566, %v399, 0
        %v569 = vsel %vm565, %v400, 0
        %v570 = vsel %vm566, %v401, 0
        %v571 = vadd.s32 %v403, 2
        %v572 = vadd.s32 %v404, 2
        %v573 = vadd.s32 %v405, 2
        %v574 = vadd.s32 %v406, 2
        %vm575 = vcmp.lt.s32.totalorder %v571, 0
        %v576 = vsub.s32 0, %v571
        %v577 = vsel %vm575, %v576, %v571
        %v578 = vshrl.u32 %v577, 4
        %v579 = vand.u32 %v577, 15
        %v580 = vsub.s32 0, %v579
        %v581 = vsel %vm575, %v580, %v579
        %vm582 = vcmp.lt.s32.totalorder %v572, 0
        %v583 = vsub.s32 0, %v572
        %v584 = vsel %vm582, %v583, %v572
        %v585 = vshrl.u32 %v584, 4
        %v586 = vand.u32 %v584, 15
        %v587 = vsub.s32 0, %v586
        %v588 = vsel %vm582, %v587, %v586
        %vm589 = vcmp.lt.s32.totalorder %v573, 0
        %v590 = vsub.s32 0, %v573
        %v591 = vsel %vm589, %v590, %v573
        %v592 = vshrl.u32 %v591, 4
        %v593 = vand.u32 %v591, 15
        %v594 = vsub.s32 0, %v593
        %v595 = vsel %vm589, %v594, %v593
        %vm596 = vcmp.lt.s32.totalorder %v574, 0
        %v597 = vsub.s32 0, %v574
        %v598 = vsel %vm596, %v597, %v574
        %v599 = vshrl.u32 %v598, 4
        %v600 = vand.u32 %v598, 15
        %v601 = vsub.s32 0, %v600
        %v602 = vsel %vm596, %v601, %v600
        %vm603 = vcmp.ne.s32.totalorder %v581, 0
        %vm604 = vcmp.ne.s32.totalorder %v588, 0
        %vm605 = vcmp.ne.s32.totalorder %v595, 0
        %vm606 = vcmp.ne.s32.totalorder %v602, 0
        %vm607 = vcmp.lt.s32.totalorder %v581, 0
        %vm608 = vcmp.lt.s32.totalorder %v588, 0
        %vm609 = vcmp.lt.s32.totalorder %v595, 0
        %vm610 = vcmp.lt.s32.totalorder %v602, 0
        %vm611 = vmand %vm607, %vm603
        %vm612 = vmand %vm608, %vm604
        %vm613 = vmand %vm609, %vm605
        %vm614 = vmand %vm610, %vm606
        %v615 = vadd.s32 %v581, 16
        %v616 = vadd.s32 %v588, 16
        %v617 = vadd.s32 %v595, 16
        %v618 = vadd.s32 %v602, 16
        %v619 = vsel %vm611, %v615, %v581
        %v620 = vsel %vm612, %v616, %v588
        %v621 = vsel %vm613, %v617, %v595
        %v622 = vsel %vm614, %v618, %v602
        %v623 = vadd.s32 %v619, 4294967294
        %v624 = vadd.s32 %v620, 4294967294
        %v625 = vadd.s32 %v621, 4294967294
        %v626 = vadd.s32 %v622, 4294967294
        %vm627 = vcmp.ge.s32.totalorder %v623, 0
        %vm628 = vcmp.ge.s32.totalorder %v624, 0
        %vm629 = vcmp.ge.s32.totalorder %v625, 0
        %vm630 = vcmp.ge.s32.totalorder %v626, 0
        %vm631 = vcmp.lt.s32.totalorder %v623, 16
        %vm632 = vcmp.lt.s32.totalorder %v624, 16
        %vm633 = vcmp.lt.s32.totalorder %v625, 16
        %vm634 = vcmp.lt.s32.totalorder %v626, 16
        %vm635 = vmand %vm627, %vm631
        %vm636 = vmand %vm628, %vm632
        %vm637 = vmand %vm629, %vm633
        %vm638 = vmand %vm630, %vm634
        %v639 = vsel %vm635, 1, 0
        %v640 = vsel %vm636, 1, 0
        %v641 = vsel %vm637, 1, 0
        %v642 = vsel %vm638, 1, 0
        %vm643 = vcmp.eq.s32.totalorder %v639, 1
        %vm644 = vcmp.eq.s32.totalorder %v640, 1
        %vm645 = vcmp.eq.s32.totalorder %v641, 1
        %vm646 = vcmp.eq.s32.totalorder %v642, 1
        %vm647 = vmpackc.low %vm644, %vm643
        %vm648 = vmpackc.low %vm646, %vm645
        %v649 = vsel %vm647, %v398, 0
        %v650 = vsel %vm648, %v399, 0
        %v651 = vsel %vm647, %v400, 0
        %v652 = vsel %vm648, %v401, 0
        %v653 = vadd.s32 %v403, 14
        %v654 = vadd.s32 %v404, 14
        %v655 = vadd.s32 %v405, 14
        %v656 = vadd.s32 %v406, 14
        %vm657 = vcmp.lt.s32.totalorder %v653, 0
        %v658 = vsub.s32 0, %v653
        %v659 = vsel %vm657, %v658, %v653
        %v660 = vshrl.u32 %v659, 4
        %v661 = vand.u32 %v659, 15
        %v662 = vsub.s32 0, %v661
        %v663 = vsel %vm657, %v662, %v661
        %vm664 = vcmp.lt.s32.totalorder %v654, 0
        %v665 = vsub.s32 0, %v654
        %v666 = vsel %vm664, %v665, %v654
        %v667 = vshrl.u32 %v666, 4
        %v668 = vand.u32 %v666, 15
        %v669 = vsub.s32 0, %v668
        %v670 = vsel %vm664, %v669, %v668
        %vm671 = vcmp.lt.s32.totalorder %v655, 0
        %v672 = vsub.s32 0, %v655
        %v673 = vsel %vm671, %v672, %v655
        %v674 = vshrl.u32 %v673, 4
        %v675 = vand.u32 %v673, 15
        %v676 = vsub.s32 0, %v675
        %v677 = vsel %vm671, %v676, %v675
        %vm678 = vcmp.lt.s32.totalorder %v656, 0
        %v679 = vsub.s32 0, %v656
        %v680 = vsel %vm678, %v679, %v656
        %v681 = vshrl.u32 %v680, 4
        %v682 = vand.u32 %v680, 15
        %v683 = vsub.s32 0, %v682
        %v684 = vsel %vm678, %v683, %v682
        %vm685 = vcmp.ne.s32.totalorder %v663, 0
        %vm686 = vcmp.ne.s32.totalorder %v670, 0
        %vm687 = vcmp.ne.s32.totalorder %v677, 0
        %vm688 = vcmp.ne.s32.totalorder %v684, 0
        %vm689 = vcmp.lt.s32.totalorder %v663, 0
        %vm690 = vcmp.lt.s32.totalorder %v670, 0
        %vm691 = vcmp.lt.s32.totalorder %v677, 0
        %vm692 = vcmp.lt.s32.totalorder %v684, 0
        %vm693 = vmand %vm689, %vm685
        %vm694 = vmand %vm690, %vm686
        %vm695 = vmand %vm691, %vm687
        %vm696 = vmand %vm692, %vm688
        %v697 = vadd.s32 %v663, 16
        %v698 = vadd.s32 %v670, 16
        %v699 = vadd.s32 %v677, 16
        %v700 = vadd.s32 %v684, 16
        %v701 = vsel %vm693, %v697, %v663
        %v702 = vsel %vm694, %v698, %v670
        %v703 = vsel %vm695, %v699, %v677
        %v704 = vsel %vm696, %v700, %v684
        %v705 = vadd.s32 %v701, 2
        %v706 = vadd.s32 %v702, 2
        %v707 = vadd.s32 %v703, 2
        %v708 = vadd.s32 %v704, 2
        %vm709 = vcmp.ge.s32.totalorder %v705, 0
        %vm710 = vcmp.ge.s32.totalorder %v706, 0
        %vm711 = vcmp.ge.s32.totalorder %v707, 0
        %vm712 = vcmp.ge.s32.totalorder %v708, 0
        %vm713 = vcmp.lt.s32.totalorder %v705, 16
        %vm714 = vcmp.lt.s32.totalorder %v706, 16
        %vm715 = vcmp.lt.s32.totalorder %v707, 16
        %vm716 = vcmp.lt.s32.totalorder %v708, 16
        %vm717 = vmand %vm709, %vm713
        %vm718 = vmand %vm710, %vm714
        %vm719 = vmand %vm711, %vm715
        %vm720 = vmand %vm712, %vm716
        %v721 = vsel %vm717, 1, 0
        %v722 = vsel %vm718, 1, 0
        %v723 = vsel %vm719, 1, 0
        %v724 = vsel %vm720, 1, 0
        %vm725 = vcmp.eq.s32.totalorder %v721, 1
        %vm726 = vcmp.eq.s32.totalorder %v722, 1
        %vm727 = vcmp.eq.s32.totalorder %v723, 1
        %vm728 = vcmp.eq.s32.totalorder %v724, 1
        %vm729 = vmpackc.low %vm726, %vm725
        %vm730 = vmpackc.low %vm728, %vm727
        %v731 = vsel %vm729, %v398, 0
        %v732 = vsel %vm730, %v399, 0
        %v733 = vsel %vm729, %v400, 0
        %v734 = vsel %vm730, %v401, 0
        %v735 = vadd.s32 %v403, 4
        %v736 = vadd.s32 %v404, 4
        %v737 = vadd.s32 %v405, 4
        %v738 = vadd.s32 %v406, 4
        %vm739 = vcmp.lt.s32.totalorder %v735, 0
        %v740 = vsub.s32 0, %v735
        %v741 = vsel %vm739, %v740, %v735
        %v742 = vshrl.u32 %v741, 4
        %v743 = vand.u32 %v741, 15
        %v744 = vsub.s32 0, %v743
        %v745 = vsel %vm739, %v744, %v743
        %vm746 = vcmp.lt.s32.totalorder %v736, 0
        %v747 = vsub.s32 0, %v736
        %v748 = vsel %vm746, %v747, %v736
        %v749 = vshrl.u32 %v748, 4
        %v750 = vand.u32 %v748, 15
        %v751 = vsub.s32 0, %v750
        %v752 = vsel %vm746, %v751, %v750
        %vm753 = vcmp.lt.s32.totalorder %v737, 0
        %v754 = vsub.s32 0, %v737
        %v755 = vsel %vm753, %v754, %v737
        %v756 = vshrl.u32 %v755, 4
        %v757 = vand.u32 %v755, 15
        %v758 = vsub.s32 0, %v757
        %v759 = vsel %vm753, %v758, %v757
        %vm760 = vcmp.lt.s32.totalorder %v738, 0
        %v761 = vsub.s32 0, %v738
        %v762 = vsel %vm760, %v761, %v738
        %v763 = vshrl.u32 %v762, 4
        %v764 = vand.u32 %v762, 15
        %v765 = vsub.s32 0, %v764
        %v766 = vsel %vm760, %v765, %v764
        %vm767 = vcmp.ne.s32.totalorder %v745, 0
        %vm768 = vcmp.ne.s32.totalorder %v752, 0
        %vm769 = vcmp.ne.s32.totalorder %v759, 0
        %vm770 = vcmp.ne.s32.totalorder %v766, 0
        %vm771 = vcmp.lt.s32.totalorder %v745, 0
        %vm772 = vcmp.lt.s32.totalorder %v752, 0
        %vm773 = vcmp.lt.s32.totalorder %v759, 0
        %vm774 = vcmp.lt.s32.totalorder %v766, 0
        %vm775 = vmand %vm771, %vm767
        %vm776 = vmand %vm772, %vm768
        %vm777 = vmand %vm773, %vm769
        %vm778 = vmand %vm774, %vm770
        %v779 = vadd.s32 %v745, 16
        %v780 = vadd.s32 %v752, 16
        %v781 = vadd.s32 %v759, 16
        %v782 = vadd.s32 %v766, 16
        %v783 = vsel %vm775, %v779, %v745
        %v784 = vsel %vm776, %v780, %v752
        %v785 = vsel %vm777, %v781, %v759
        %v786 = vsel %vm778, %v782, %v766
        %v787 = vadd.s32 %v783, 4294967292
        %v788 = vadd.s32 %v784, 4294967292
        %v789 = vadd.s32 %v785, 4294967292
        %v790 = vadd.s32 %v786, 4294967292
        %vm791 = vcmp.ge.s32.totalorder %v787, 0
        %vm792 = vcmp.ge.s32.totalorder %v788, 0
        %vm793 = vcmp.ge.s32.totalorder %v789, 0
        %vm794 = vcmp.ge.s32.totalorder %v790, 0
        %vm795 = vcmp.lt.s32.totalorder %v787, 16
        %vm796 = vcmp.lt.s32.totalorder %v788, 16
        %vm797 = vcmp.lt.s32.totalorder %v789, 16
        %vm798 = vcmp.lt.s32.totalorder %v790, 16
        %vm799 = vmand %vm791, %vm795
        %vm800 = vmand %vm792, %vm796
        %vm801 = vmand %vm793, %vm797
        %vm802 = vmand %vm794, %vm798
        %v803 = vsel %vm799, 1, 0
        %v804 = vsel %vm800, 1, 0
        %v805 = vsel %vm801, 1, 0
        %v806 = vsel %vm802, 1, 0
        %vm807 = vcmp.eq.s32.totalorder %v803, 1
        %vm808 = vcmp.eq.s32.totalorder %v804, 1
        %vm809 = vcmp.eq.s32.totalorder %v805, 1
        %vm810 = vcmp.eq.s32.totalorder %v806, 1
        %vm811 = vmpackc.low %vm808, %vm807
        %vm812 = vmpackc.low %vm810, %vm809
        %v813 = vsel %vm811, %v398, 0
        %v814 = vsel %vm812, %v399, 0
        %v815 = vsel %vm811, %v400, 0
        %v816 = vsel %vm812, %v401, 0
        %v817 = vadd.s32 %v403, 12
        %v818 = vadd.s32 %v404, 12
        %v819 = vadd.s32 %v405, 12
        %v820 = vadd.s32 %v406, 12
        %vm821 = vcmp.lt.s32.totalorder %v817, 0
        %v822 = vsub.s32 0, %v817
        %v823 = vsel %vm821, %v822, %v817
        %v824 = vshrl.u32 %v823, 4
        %v825 = vand.u32 %v823, 15
        %v826 = vsub.s32 0, %v825
        %v827 = vsel %vm821, %v826, %v825
        %vm828 = vcmp.lt.s32.totalorder %v818, 0
        %v829 = vsub.s32 0, %v818
        %v830 = vsel %vm828, %v829, %v818
        %v831 = vshrl.u32 %v830, 4
        %v832 = vand.u32 %v830, 15
        %v833 = vsub.s32 0, %v832
        %v834 = vsel %vm828, %v833, %v832
        %vm835 = vcmp.lt.s32.totalorder %v819, 0
        %v836 = vsub.s32 0, %v819
        %v837 = vsel %vm835, %v836, %v819
        %v838 = vshrl.u32 %v837, 4
        %v839 = vand.u32 %v837, 15
        %v840 = vsub.s32 0, %v839
        %v841 = vsel %vm835, %v840, %v839
        %vm842 = vcmp.lt.s32.totalorder %v820, 0
        %v843 = vsub.s32 0, %v820
        %v844 = vsel %vm842, %v843, %v820
        %v845 = vshrl.u32 %v844, 4
        %v846 = vand.u32 %v844, 15
        %v847 = vsub.s32 0, %v846
        %v848 = vsel %vm842, %v847, %v846
        %vm849 = vcmp.ne.s32.totalorder %v827, 0
        %vm850 = vcmp.ne.s32.totalorder %v834, 0
        %vm851 = vcmp.ne.s32.totalorder %v841, 0
        %vm852 = vcmp.ne.s32.totalorder %v848, 0
        %vm853 = vcmp.lt.s32.totalorder %v827, 0
        %vm854 = vcmp.lt.s32.totalorder %v834, 0
        %vm855 = vcmp.lt.s32.totalorder %v841, 0
        %vm856 = vcmp.lt.s32.totalorder %v848, 0
        %vm857 = vmand %vm853, %vm849
        %vm858 = vmand %vm854, %vm850
        %vm859 = vmand %vm855, %vm851
        %vm860 = vmand %vm856, %vm852
        %v861 = vadd.s32 %v827, 16
        %v862 = vadd.s32 %v834, 16
        %v863 = vadd.s32 %v841, 16
        %v864 = vadd.s32 %v848, 16
        %v865 = vsel %vm857, %v861, %v827
        %v866 = vsel %vm858, %v862, %v834
        %v867 = vsel %vm859, %v863, %v841
        %v868 = vsel %vm860, %v864, %v848
        %v869 = vadd.s32 %v865, 4
        %v870 = vadd.s32 %v866, 4
        %v871 = vadd.s32 %v867, 4
        %v872 = vadd.s32 %v868, 4
        %vm873 = vcmp.ge.s32.totalorder %v869, 0
        %vm874 = vcmp.ge.s32.totalorder %v870, 0
        %vm875 = vcmp.ge.s32.totalorder %v871, 0
        %vm876 = vcmp.ge.s32.totalorder %v872, 0
        %vm877 = vcmp.lt.s32.totalorder %v869, 16
        %vm878 = vcmp.lt.s32.totalorder %v870, 16
        %vm879 = vcmp.lt.s32.totalorder %v871, 16
        %vm880 = vcmp.lt.s32.totalorder %v872, 16
        %vm881 = vmand %vm873, %vm877
        %vm882 = vmand %vm874, %vm878
        %vm883 = vmand %vm875, %vm879
        %vm884 = vmand %vm876, %vm880
        %v885 = vsel %vm881, 1, 0
        %v886 = vsel %vm882, 1, 0
        %v887 = vsel %vm883, 1, 0
        %v888 = vsel %vm884, 1, 0
        %vm889 = vcmp.eq.s32.totalorder %v885, 1
        %vm890 = vcmp.eq.s32.totalorder %v886, 1
        %vm891 = vcmp.eq.s32.totalorder %v887, 1
        %vm892 = vcmp.eq.s32.totalorder %v888, 1
        %vm893 = vmpackc.low %vm890, %vm889
        %vm894 = vmpackc.low %vm892, %vm891
        %v895 = vsel %vm893, %v398, 0
        %v896 = vsel %vm894, %v399, 0
        %v897 = vsel %vm893, %v400, 0
        %v898 = vsel %vm894, %v401, 0
        %v899 = vld [vmem:[%s1] sm:$0xf]
        %v900 = vld [vmem:[%s2] sm:$0xff]
        %902 = vset.pattern.permute.xlu0 0
        %903 = vperm.xlu0 %902, %v900
        %v904 = vpop.permute.xlu0 %903
        %v910 = vunpack.c.h.b16 %v398
        %v911 = vunpack.c.l.b16 %v399
        %v912 = vunpack.c.h.b16 %v400
        %v913 = vunpack.c.l.b16 %v401
        %v914 = vpack.c.b16 %v912, %v910
        %v915 = vpack.c.b16 %v913, %v911
        %vm918 = vcmask 130048
        %v920 = vsel %vm918, %v899, 0
        %922 = vmatpush.bf16.msra.mxu0 0
        %923 = vmatpush.bf16.msra.mxu0 0
        %924 = vmatpush.bf16.msra.mxu0 0
        %925 = vmatpush.bf16.msra.mxu0 0
        %926 = vmatpush.bf16.msra.mxu0 0
        %927 = vmatpush.bf16.msra.mxu0 0
        %928 = vmatpush.bf16.msra.mxu0 0
        %929 = vmatpush.bf16.msra.mxu0 %v914
        %930 = vmatmul.bf16.gmra.mxu0 %v920
        %v931 = vpop.f32.mrf.mxu0
        %v932 = vadd.f32 %v904, %v931
        %v933 = vpop.f32.mrf.mxu0
        %934 = vdwg.mxu0
        %935 = vmatpush.bf16.msra.mxu0 0
        %936 = vmatpush.bf16.msra.mxu0 0
        %937 = vmatpush.bf16.msra.mxu0 0
        %938 = vmatpush.bf16.msra.mxu0 0
        %939 = vmatpush.bf16.msra.mxu0 0
        %940 = vmatpush.bf16.msra.mxu0 0
        %941 = vmatpush.bf16.msra.mxu0 0
        %942 = vmatpush.bf16.msra.mxu0 %v915
        %943 = vmatmul.bf16.gmra.mxu0 %v920
        %v944 = vpop.f32.mrf.mxu0
        %v945 = vadd.f32 %v904, %v944
        %v946 = vpop.f32.mrf.mxu0
        %947 = vdwg.mxu0
        %v948 = vmax.f32 %v932, 0.0
        %v949 = vmax.f32 %v945, 0.0
        %v954 = vunpack.c.l.b16 %v485
        %v955 = vunpack.c.h.b16 %v485
        %v956 = vunpack.c.l.b16 %v486
        %v957 = vunpack.c.l.b16 %v487
        %v958 = vunpack.c.h.b16 %v487
        %v959 = vunpack.c.l.b16 %v488
        %v960 = vpack.c.b16 %v957, %v954
        %v961 = vpack.c.b16 %v958, %v955
        %v962 = vpack.c.b16 %v959, %v956
        %v963 = vunpack.c.l.b16 %v398
        %v964 = vunpack.c.l.b16 %v400
        %v965 = vpack.c.b16 %v964, %v963
        %966 = vrot.lane.b32.xlu0 %v965, 127
        %v967 = vpop.permute.xlu0 %966
        %968 = vrot.lane.b32.xlu0 %v914, 127
        %v969 = vpop.permute.xlu0 %968
        %970 = vrot.lane.b32.xlu0 %v915, 127
        %v971 = vpop.permute.xlu0 %970
        %vm972 = vcmask 1039360
        %v973 = vsel %vm972, %v967, %v969
        %v974 = vsel %vm972, %v969, %v971
        %v979 = vunpack.c.l.b16 %v567
        %v980 = vunpack.c.h.b16 %v567
        %v981 = vunpack.c.l.b16 %v568
        %v982 = vunpack.c.l.b16 %v569
        %v983 = vunpack.c.h.b16 %v569
        %v984 = vunpack.c.l.b16 %v570
        %v985 = vpack.c.b16 %v982, %v979
        %v986 = vpack.c.b16 %v983, %v980
        %v987 = vpack.c.b16 %v984, %v981
        %988 = vrot.lane.b32.xlu0 %v985, 126
        %v989 = vpop.permute.xlu0 %988
        %990 = vrot.lane.b32.xlu0 %v986, 126
        %v991 = vpop.permute.xlu0 %990
        %992 = vrot.lane.b32.xlu0 %v987, 126
        %v993 = vpop.permute.xlu0 %992
        %vm994 = vcmask 1031168
        %v995 = vsel %vm994, %v989, %v991
        %v996 = vsel %vm994, %v991, %v993
        %997 = vrot.lane.b32.xlu0 %v960, 112
        %v998 = vpop.permute.xlu0 %997
        %999 = vrot.lane.b32.xlu0 %v961, 112
        %v1000 = vpop.permute.xlu0 %999
        %1001 = vrot.lane.b32.xlu0 %v962, 112
        %v1002 = vpop.permute.xlu0 %1001
        %vm1003 = vcmask 916480
        %v1004 = vsel %vm1003, %v998, %v1000
        %v1005 = vsel %vm1003, %v1000, %v1002
        %1006 = vrot.lane.b32.xlu0 %v914, 111
        %v1007 = vpop.permute.xlu0 %1006
        %1008 = vrot.lane.b32.xlu0 %v915, 111
        %v1009 = vpop.permute.xlu0 %1008
        %vm1010 = vcmask 908288
        %v1011 = vsel %vm1010, %v1007, %v1009
        %v1012 = vunpack.c.h.b16 %v568
        %v1013 = vunpack.c.h.b16 %v570
        %v1014 = vpack.c.b16 %v1013, %v1012
        %1015 = vrot.lane.b32.xlu0 %v986, 110
        %v1016 = vpop.permute.xlu0 %1015
        %1017 = vrot.lane.b32.xlu0 %v987, 110
        %v1018 = vpop.permute.xlu0 %1017
        %1019 = vrot.lane.b32.xlu0 %v1014, 110
        %v1020 = vpop.permute.xlu0 %1019
        %vm1021 = vcmask 900096
        %v1022 = vsel %vm1021, %v1016, %v1018
        %v1023 = vsel %vm1021, %v1018, %v1020
        %v1024 = vunpack.c.h.b16 %v486
        %v1025 = vunpack.c.h.b16 %v488
        %v1026 = vpack.c.b16 %v1025, %v1024
        %1027 = vrot.lane.b32.xlu0 %v961, 96
        %v1028 = vpop.permute.xlu0 %1027
        %1029 = vrot.lane.b32.xlu0 %v962, 96
        %v1030 = vpop.permute.xlu0 %1029
        %1031 = vrot.lane.b32.xlu0 %v1026, 96
        %v1032 = vpop.permute.xlu0 %1031
        %vm1033 = vcmask 785408
        %v1034 = vsel %vm1033, %v1028, %v1030
        %v1035 = vsel %vm1033, %v1030, %v1032
        %v1036 = vunpack.c.h.b16 %v399
        %v1037 = vunpack.c.h.b16 %v401
        %v1038 = vpack.c.b16 %v1037, %v1036
        %1039 = vrot.lane.b32.xlu0 %v914, 95
        %v1040 = vpop.permute.xlu0 %1039
        %1041 = vrot.lane.b32.xlu0 %v915, 95
        %v1042 = vpop.permute.xlu0 %1041
        %1043 = vrot.lane.b32.xlu0 %v1038, 95
        %v1044 = vpop.permute.xlu0 %1043
        %vm1045 = vcmask 777216
        %v1046 = vsel %vm1045, %v1040, %v1042
        %v1047 = vsel %vm1045, %v1042, %v1044
        %1048 = vrot.lane.b32.xlu0 %v986, 94
        %v1049 = vpop.permute.xlu0 %1048
        %1050 = vrot.lane.b32.xlu0 %v987, 94
        %v1051 = vpop.permute.xlu0 %1050
        %1052 = vrot.lane.b32.xlu0 %v1014, 94
        %v1053 = vpop.permute.xlu0 %1052
        %vm1054 = vcmask 769024
        %v1055 = vsel %vm1054, %v1049, %v1051
        %v1056 = vsel %vm1054, %v1051, %v1053
        %v1057 = vld [vmem:[%s3] sm:$0xff]
        %v1058 = vld [vmem:[%s4] sm:$0xff]
        %1060 = vset.pattern.permute.xlu0 0
        %1061 = vperm.xlu0 %1060, %v1058
        %v1062 = vpop.permute.xlu0 %1061
        %v1065 = vunpack.c.l.b16 %v1057
        %v1066 = vunpack.c.h.b16 %v1057
        %v1067 = vpack.c.b16 %v1065, %v1065
        %v1068 = vpack.c.b16 %v1066, %v1066
        %1070 = vrot.lane.b32.xlu0 %v960, 17
        %v1071 = vpop.permute.xlu0 %1070
        %1072 = vrot.lane.b32.xlu0 %v961, 17
        %v1073 = vpop.permute.xlu0 %1072
        %1074 = vrot.lane.b32.xlu0 %v962, 17
        %v1075 = vpop.permute.xlu0 %1074
        %1076 = vrot.lane.b32.xlu0 %v973, 17
        %v1077 = vpop.permute.xlu0 %1076
        %1078 = vrot.lane.b32.xlu0 %v974, 17
        %v1079 = vpop.permute.xlu0 %1078
        %1080 = vrot.lane.b32.xlu0 %v971, 17
        %v1081 = vpop.permute.xlu0 %1080
        %1082 = vrot.lane.b32.xlu0 %v995, 17
        %v1083 = vpop.permute.xlu0 %1082
        %1084 = vrot.lane.b32.xlu0 %v996, 17
        %v1085 = vpop.permute.xlu0 %1084
        %1086 = vrot.lane.b32.xlu0 %v993, 17
        %v1087 = vpop.permute.xlu0 %1086
        %1088 = vrot.lane.b32.xlu0 %v1004, 17
        %v1089 = vpop.permute.xlu0 %1088
        %1090 = vrot.lane.b32.xlu0 %v1005, 17
        %v1091 = vpop.permute.xlu0 %1090
        %1092 = vrot.lane.b32.xlu0 %v1002, 17
        %v1093 = vpop.permute.xlu0 %1092
        %1094 = vrot.lane.b32.xlu0 %v1007, 17
        %v1095 = vpop.permute.xlu0 %1094
        %1096 = vrot.lane.b32.xlu0 %v1011, 17
        %v1097 = vpop.permute.xlu0 %1096
        %1098 = vrot.lane.b32.xlu0 %v1009, 17
        %v1099 = vpop.permute.xlu0 %1098
        %1100 = vrot.lane.b32.xlu0 %v1016, 17
        %v1101 = vpop.permute.xlu0 %1100
        %1102 = vrot.lane.b32.xlu0 %v1022, 17
        %v1103 = vpop.permute.xlu0 %1102
        %1104 = vrot.lane.b32.xlu0 %v1023, 17
        %v1105 = vpop.permute.xlu0 %1104
        %1106 = vrot.lane.b32.xlu0 %v1028, 17
        %v1107 = vpop.permute.xlu0 %1106
        %1108 = vrot.lane.b32.xlu0 %v1034, 17
        %v1109 = vpop.permute.xlu0 %1108
        %1110 = vrot.lane.b32.xlu0 %v1035, 17
        %v1111 = vpop.permute.xlu0 %1110
        %1112 = vrot.lane.b32.xlu0 %v1040, 17
        %v1113 = vpop.permute.xlu0 %1112
        %1114 = vrot.lane.b32.xlu0 %v1046, 17
        %v1115 = vpop.permute.xlu0 %1114
        %1116 = vrot.lane.b32.xlu0 %v1047, 17
        %v1117 = vpop.permute.xlu0 %1116
        %1118 = vrot.lane.b32.xlu0 %v1049, 17
        %v1119 = vpop.permute.xlu0 %1118
        %1120 = vrot.lane.b32.xlu0 %v1055, 17
        %v1121 = vpop.permute.xlu0 %1120
        %1122 = vrot.lane.b32.xlu0 %v1056, 17
        %v1123 = vpop.permute.xlu0 %1122
        %vm1124 = vcmask 138240
        %v1125 = vsel %vm1124, %v1071, %v1073
        %v1126 = vsel %vm1124, %v1073, %v1075
        %v1127 = vsel %vm1124, %v1077, %v1079
        %v1128 = vsel %vm1124, %v1079, %v1081
        %v1129 = vsel %vm1124, %v1083, %v1085
        %v1130 = vsel %vm1124, %v1085, %v1087
        %v1131 = vsel %vm1124, %v1089, %v1091
        %v1132 = vsel %vm1124, %v1091, %v1093
        %v1133 = vsel %vm1124, %v1095, %v1097
        %v1134 = vsel %vm1124, %v1097, %v1099
        %v1135 = vsel %vm1124, %v1101, %v1103
        %v1136 = vsel %vm1124, %v1103, %v1105
        %v1137 = vsel %vm1124, %v1107, %v1109
        %v1138 = vsel %vm1124, %v1109, %v1111
        %v1139 = vsel %vm1124, %v1113, %v1115
        %v1140 = vsel %vm1124, %v1115, %v1117
        %v1141 = vsel %vm1124, %v1119, %v1121
        %v1142 = vsel %vm1124, %v1121, %v1123
        %v1162 = vsel %vm918, %v1068, 0
        %1164 = vmatpush.bf16.msra.mxu0 %v1139
        %1165 = vmatpush.bf16.msra.mxu0 %v1137
        %1166 = vmatpush.bf16.msra.mxu0 %v1135
        %1167 = vmatpush.bf16.msra.mxu0 %v1133
        %1168 = vmatpush.bf16.msra.mxu0 %v1131
        %1169 = vmatpush.bf16.msra.mxu0 %v1129
        %1170 = vmatpush.bf16.msra.mxu0 %v1127
        %1171 = vmatpush.bf16.msra.mxu0 %v1125
        %1172 = vmatmul.bf16.gmra.mxu0 %v1067
        %v1173 = vpop.f32.mrf.mxu0
        %v1174 = vadd.f32 %v1062, %v1173
        %v1175 = vpop.f32.mrf.mxu0
        %1176 = vdwg.mxu0
        %1177 = vmatpush.bf16.msra.mxu0 0
        %1178 = vmatpush.bf16.msra.mxu0 0
        %1179 = vmatpush.bf16.msra.mxu0 0
        %1180 = vmatpush.bf16.msra.mxu0 0
        %1181 = vmatpush.bf16.msra.mxu0 0
        %1182 = vmatpush.bf16.msra.mxu0 0
        %1183 = vmatpush.bf16.msra.mxu0 0
        %1184 = vmatpush.bf16.msra.mxu0 %v1141
        %1185 = vmatmul.bf16.gmra.mxu0 %v1162
        %v1186 = vpop.f32.mrf.mxu0
        %v1187 = vadd.f32 %v1174, %v1186
        %v1188 = vpop.f32.mrf.mxu0
        %1189 = vdwg.mxu0
        %1190 = vmatpush.bf16.msra.mxu0 %v1140
        %1191 = vmatpush.bf16.msra.mxu0 %v1138
        %1192 = vmatpush.bf16.msra.mxu0 %v1136
        %1193 = vmatpush.bf16.msra.mxu0 %v1134
        %1194 = vmatpush.bf16.msra.mxu0 %v1132
        %1195 = vmatpush.bf16.msra.mxu0 %v1130
        %1196 = vmatpush.bf16.msra.mxu0 %v1128
        %1197 = vmatpush.bf16.msra.mxu0 %v1126
        %1198 = vmatmul.bf16.gmra.mxu0 %v1067
        %v1199 = vpop.f32.mrf.mxu0
        %v1200 = vadd.f32 %v1062, %v1199
        %v1201 = vpop.f32.mrf.mxu0
        %1202 = vdwg.mxu0
        %1203 = vmatpush.bf16.msra.mxu0 0
        %1204 = vmatpush.bf16.msra.mxu0 0
        %1205 = vmatpush.bf16.msra.mxu0 0
        %1206 = vmatpush.bf16.msra.mxu0 0
        %1207 = vmatpush.bf16.msra.mxu0 0
        %1208 = vmatpush.bf16.msra.mxu0 0
        %1209 = vmatpush.bf16.msra.mxu0 0
        %1210 = vmatpush.bf16.msra.mxu0 %v1142
        %1211 = vmatmul.bf16.gmra.mxu0 %v1162
        %v1212 = vpop.f32.mrf.mxu0
        %v1213 = vadd.f32 %v1200, %v1212
        %v1214 = vpop.f32.mrf.mxu0
        %1215 = vdwg.mxu0
        %v1216 = vmax.f32 %v1187, 0.0
        %v1217 = vmax.f32 %v1213, 0.0
        %v1222 = vunpack.c.l.b16 %v649
        %v1223 = vunpack.c.h.b16 %v649
        %v1224 = vunpack.c.l.b16 %v650
        %v1225 = vunpack.c.l.b16 %v651
        %v1226 = vunpack.c.h.b16 %v651
        %v1227 = vunpack.c.l.b16 %v652
        %v1228 = vpack.c.b16 %v1225, %v1222
        %v1229 = vpack.c.b16 %v1226, %v1223
        %v1230 = vpack.c.b16 %v1227, %v1224
        %1231 = vrot.lane.b32.xlu0 %v965, 126
        %v1232 = vpop.permute.xlu0 %1231
        %1233 = vrot.lane.b32.xlu0 %v914, 126
        %v1234 = vpop.permute.xlu0 %1233
        %1235 = vrot.lane.b32.xlu0 %v915, 126
        %v1236 = vpop.permute.xlu0 %1235
        %v1237 = vsel %vm994, %v1232, %v1234
        %v1238 = vsel %vm994, %v1234, %v1236
        %v1243 = vunpack.c.l.b16 %v731
        %v1244 = vunpack.c.h.b16 %v731
        %v1245 = vunpack.c.l.b16 %v732
        %v1246 = vunpack.c.l.b16 %v733
        %v1247 = vunpack.c.h.b16 %v733
        %v1248 = vunpack.c.l.b16 %v734
        %v1249 = vpack.c.b16 %v1246, %v1243
        %v1250 = vpack.c.b16 %v1247, %v1244
        %v1251 = vpack.c.b16 %v1248, %v1245
        %1252 = vrot.lane.b32.xlu0 %v1249, 124
        %v1253 = vpop.permute.xlu0 %1252
        %1254 = vrot.lane.b32.xlu0 %v1250, 124
        %v1255 = vpop.permute.xlu0 %1254
        %1256 = vrot.lane.b32.xlu0 %v1251, 124
        %v1257 = vpop.permute.xlu0 %1256
        %vm1258 = vcmask 1014784
        %v1259 = vsel %vm1258, %v1253, %v1255
        %v1260 = vsel %vm1258, %v1255, %v1257
        %1261 = vrot.lane.b32.xlu0 %v1228, 96
        %v1262 = vpop.permute.xlu0 %1261
        %1263 = vrot.lane.b32.xlu0 %v1229, 96
        %v1264 = vpop.permute.xlu0 %1263
        %1265 = vrot.lane.b32.xlu0 %v1230, 96
        %v1266 = vpop.permute.xlu0 %1265
        %v1267 = vsel %vm1033, %v1262, %v1264
        %v1268 = vsel %vm1033, %v1264, %v1266
        %1269 = vrot.lane.b32.xlu0 %v914, 94
        %v1270 = vpop.permute.xlu0 %1269
        %1271 = vrot.lane.b32.xlu0 %v915, 94
        %v1272 = vpop.permute.xlu0 %1271
        %v1273 = vsel %vm1054, %v1270, %v1272
        %v1274 = vunpack.c.h.b16 %v732
        %v1275 = vunpack.c.h.b16 %v734
        %v1276 = vpack.c.b16 %v1275, %v1274
        %1277 = vrot.lane.b32.xlu0 %v1250, 92
        %v1278 = vpop.permute.xlu0 %1277
        %1279 = vrot.lane.b32.xlu0 %v1251, 92
        %v1280 = vpop.permute.xlu0 %1279
        %1281 = vrot.lane.b32.xlu0 %v1276, 92
        %v1282 = vpop.permute.xlu0 %1281
        %vm1283 = vcmask 752640
        %v1284 = vsel %vm1283, %v1278, %v1280
        %v1285 = vsel %vm1283, %v1280, %v1282
        %v1286 = vunpack.c.h.b16 %v650
        %v1287 = vunpack.c.h.b16 %v652
        %v1288 = vpack.c.b16 %v1287, %v1286
        %1289 = vrot.lane.b32.xlu0 %v1229, 64
        %v1290 = vpop.permute.xlu0 %1289
        %1291 = vrot.lane.b32.xlu0 %v1230, 64
        %v1292 = vpop.permute.xlu0 %1291
        %1293 = vrot.lane.b32.xlu0 %v1288, 64
        %v1294 = vpop.permute.xlu0 %1293
        %vm1295 = vcmask 523264
        %v1296 = vsel %vm1295, %v1290, %v1292
        %v1297 = vsel %vm1295, %v1292, %v1294
        %1298 = vrot.lane.b32.xlu0 %v914, 62
        %v1299 = vpop.permute.xlu0 %1298
        %1300 = vrot.lane.b32.xlu0 %v915, 62
        %v1301 = vpop.permute.xlu0 %1300
        %1302 = vrot.lane.b32.xlu0 %v1038, 62
        %v1303 = vpop.permute.xlu0 %1302
        %vm1304 = vcmask 506880
        %v1305 = vsel %vm1304, %v1299, %v1301
        %v1306 = vsel %vm1304, %v1301, %v1303
        %1307 = vrot.lane.b32.xlu0 %v1250, 60
        %v1308 = vpop.permute.xlu0 %1307
        %1309 = vrot.lane.b32.xlu0 %v1251, 60
        %v1310 = vpop.permute.xlu0 %1309
        %1311 = vrot.lane.b32.xlu0 %v1276, 60
        %v1312 = vpop.permute.xlu0 %1311
        %vm1313 = vcmask 490496
        %v1314 = vsel %vm1313, %v1308, %v1310
        %v1315 = vsel %vm1313, %v1310, %v1312
        %s1316 = scalar_lea.vmem %s3, 8
        %v1317 = vld [vmem:[%s1316] sm:$0xff]
        %s1318 = scalar_lea.vmem %s4, 8
        %v1319 = vld [vmem:[%s1318] sm:$0xff]
        %1321 = vset.pattern.permute.xlu0 0
        %1322 = vperm.xlu0 %1321, %v1319
        %v1323 = vpop.permute.xlu0 %1322
        %v1326 = vunpack.c.l.b16 %v1317
        %v1327 = vunpack.c.h.b16 %v1317
        %v1328 = vpack.c.b16 %v1326, %v1326
        %v1329 = vpack.c.b16 %v1327, %v1327
        %1331 = vrot.lane.b32.xlu0 %v1228, 34
        %v1332 = vpop.permute.xlu0 %1331
        %1333 = vrot.lane.b32.xlu0 %v1229, 34
        %v1334 = vpop.permute.xlu0 %1333
        %1335 = vrot.lane.b32.xlu0 %v1230, 34
        %v1336 = vpop.permute.xlu0 %1335
        %1337 = vrot.lane.b32.xlu0 %v1237, 34
        %v1338 = vpop.permute.xlu0 %1337
        %1339 = vrot.lane.b32.xlu0 %v1238, 34
        %v1340 = vpop.permute.xlu0 %1339
        %1341 = vrot.lane.b32.xlu0 %v1236, 34
        %v1342 = vpop.permute.xlu0 %1341
        %1343 = vrot.lane.b32.xlu0 %v1259, 34
        %v1344 = vpop.permute.xlu0 %1343
        %1345 = vrot.lane.b32.xlu0 %v1260, 34
        %v1346 = vpop.permute.xlu0 %1345
        %1347 = vrot.lane.b32.xlu0 %v1257, 34
        %v1348 = vpop.permute.xlu0 %1347
        %1349 = vrot.lane.b32.xlu0 %v1267, 34
        %v1350 = vpop.permute.xlu0 %1349
        %1351 = vrot.lane.b32.xlu0 %v1268, 34
        %v1352 = vpop.permute.xlu0 %1351
        %1353 = vrot.lane.b32.xlu0 %v1266, 34
        %v1354 = vpop.permute.xlu0 %1353
        %1355 = vrot.lane.b32.xlu0 %v1270, 34
        %v1356 = vpop.permute.xlu0 %1355
        %1357 = vrot.lane.b32.xlu0 %v1273, 34
        %v1358 = vpop.permute.xlu0 %1357
        %1359 = vrot.lane.b32.xlu0 %v1272, 34
        %v1360 = vpop.permute.xlu0 %1359
        %1361 = vrot.lane.b32.xlu0 %v1278, 34
        %v1362 = vpop.permute.xlu0 %1361
        %1363 = vrot.lane.b32.xlu0 %v1284, 34
        %v1364 = vpop.permute.xlu0 %1363
        %1365 = vrot.lane.b32.xlu0 %v1285, 34
        %v1366 = vpop.permute.xlu0 %1365
        %1367 = vrot.lane.b32.xlu0 %v1290, 34
        %v1368 = vpop.permute.xlu0 %1367
        %1369 = vrot.lane.b32.xlu0 %v1296, 34
        %v1370 = vpop.permute.xlu0 %1369
        %1371 = vrot.lane.b32.xlu0 %v1297, 34
        %v1372 = vpop.permute.xlu0 %1371
        %1373 = vrot.lane.b32.xlu0 %v1299, 34
        %v1374 = vpop.permute.xlu0 %1373
        %1375 = vrot.lane.b32.xlu0 %v1305, 34
        %v1376 = vpop.permute.xlu0 %1375
        %1377 = vrot.lane.b32.xlu0 %v1306, 34
        %v1378 = vpop.permute.xlu0 %1377
        %1379 = vrot.lane.b32.xlu0 %v1308, 34
        %v1380 = vpop.permute.xlu0 %1379
        %1381 = vrot.lane.b32.xlu0 %v1314, 34
        %v1382 = vpop.permute.xlu0 %1381
        %1383 = vrot.lane.b32.xlu0 %v1315, 34
        %v1384 = vpop.permute.xlu0 %1383
        %vm1385 = vcmask 277504
        %v1386 = vsel %vm1385, %v1332, %v1334
        %v1387 = vsel %vm1385, %v1334, %v1336
        %v1388 = vsel %vm1385, %v1338, %v1340
        %v1389 = vsel %vm1385, %v1340, %v1342
        %v1390 = vsel %vm1385, %v1344, %v1346
        %v1391 = vsel %vm1385, %v1346, %v1348
        %v1392 = vsel %vm1385, %v1350, %v1352
        %v1393 = vsel %vm1385, %v1352, %v1354
        %v1394 = vsel %vm1385, %v1356, %v1358
        %v1395 = vsel %vm1385, %v1358, %v1360
        %v1396 = vsel %vm1385, %v1362, %v1364
        %v1397 = vsel %vm1385, %v1364, %v1366
        %v1398 = vsel %vm1385, %v1368, %v1370
        %v1399 = vsel %vm1385, %v1370, %v1372
        %v1400 = vsel %vm1385, %v1374, %v1376
        %v1401 = vsel %vm1385, %v1376, %v1378
        %v1402 = vsel %vm1385, %v1380, %v1382
        %v1403 = vsel %vm1385, %v1382, %v1384
        %v1423 = vsel %vm918, %v1329, 0
        %1425 = vmatpush.bf16.msra.mxu0 %v1400
        %1426 = vmatpush.bf16.msra.mxu0 %v1398
        %1427 = vmatpush.bf16.msra.mxu0 %v1396
        %1428 = vmatpush.bf16.msra.mxu0 %v1394
        %1429 = vmatpush.bf16.msra.mxu0 %v1392
        %1430 = vmatpush.bf16.msra.mxu0 %v1390
        %1431 = vmatpush.bf16.msra.mxu0 %v1388
        %1432 = vmatpush.bf16.msra.mxu0 %v1386
        %1433 = vmatmul.bf16.gmra.mxu0 %v1328
        %v1434 = vpop.f32.mrf.mxu0
        %v1435 = vadd.f32 %v1323, %v1434
        %v1436 = vpop.f32.mrf.mxu0
        %1437 = vdwg.mxu0
        %1438 = vmatpush.bf16.msra.mxu0 0
        %1439 = vmatpush.bf16.msra.mxu0 0
        %1440 = vmatpush.bf16.msra.mxu0 0
        %1441 = vmatpush.bf16.msra.mxu0 0
        %1442 = vmatpush.bf16.msra.mxu0 0
        %1443 = vmatpush.bf16.msra.mxu0 0
        %1444 = vmatpush.bf16.msra.mxu0 0
        %1445 = vmatpush.bf16.msra.mxu0 %v1402
        %1446 = vmatmul.bf16.gmra.mxu0 %v1423
        %v1447 = vpop.f32.mrf.mxu0
        %v1448 = vadd.f32 %v1435, %v1447
        %v1449 = vpop.f32.mrf.mxu0
        %1450 = vdwg.mxu0
        %1451 = vmatpush.bf16.msra.mxu0 %v1401
        %1452 = vmatpush.bf16.msra.mxu0 %v1399
        %1453 = vmatpush.bf16.msra.mxu0 %v1397
        %1454 = vmatpush.bf16.msra.mxu0 %v1395
        %1455 = vmatpush.bf16.msra.mxu0 %v1393
        %1456 = vmatpush.bf16.msra.mxu0 %v1391
        %1457 = vmatpush.bf16.msra.mxu0 %v1389
        %1458 = vmatpush.bf16.msra.mxu0 %v1387
        %1459 = vmatmul.bf16.gmra.mxu0 %v1328
        %v1460 = vpop.f32.mrf.mxu0
        %v1461 = vadd.f32 %v1323, %v1460
        %v1462 = vpop.f32.mrf.mxu0
        %1463 = vdwg.mxu0
        %1464 = vmatpush.bf16.msra.mxu0 0
        %1465 = vmatpush.bf16.msra.mxu0 0
        %1466 = vmatpush.bf16.msra.mxu0 0
        %1467 = vmatpush.bf16.msra.mxu0 0
        %1468 = vmatpush.bf16.msra.mxu0 0
        %1469 = vmatpush.bf16.msra.mxu0 0
        %1470 = vmatpush.bf16.msra.mxu0 0
        %1471 = vmatpush.bf16.msra.mxu0 %v1403
        %1472 = vmatmul.bf16.gmra.mxu0 %v1423
        %v1473 = vpop.f32.mrf.mxu0
        %v1474 = vadd.f32 %v1461, %v1473
        %v1475 = vpop.f32.mrf.mxu0
        %1476 = vdwg.mxu0
        %v1477 = vmax.f32 %v1448, 0.0
        %v1478 = vmax.f32 %v1474, 0.0
        %v1483 = vunpack.c.l.b16 %v813
        %v1484 = vunpack.c.h.b16 %v813
        %v1485 = vunpack.c.l.b16 %v814
        %v1486 = vunpack.c.l.b16 %v815
        %v1487 = vunpack.c.h.b16 %v815
        %v1488 = vunpack.c.l.b16 %v816
        %v1489 = vpack.c.b16 %v1486, %v1483
        %v1490 = vpack.c.b16 %v1487, %v1484
        %v1491 = vpack.c.b16 %v1488, %v1485
        %1492 = vrot.lane.b32.xlu0 %v965, 124
        %v1493 = vpop.permute.xlu0 %1492
        %1494 = vrot.lane.b32.xlu0 %v914, 124
        %v1495 = vpop.permute.xlu0 %1494
        %1496 = vrot.lane.b32.xlu0 %v915, 124
        %v1497 = vpop.permute.xlu0 %1496
        %v1498 = vsel %vm1258, %v1493, %v1495
        %v1499 = vsel %vm1258, %v1495, %v1497
        %v1504 = vunpack.c.l.b16 %v895
        %v1505 = vunpack.c.h.b16 %v895
        %v1506 = vunpack.c.l.b16 %v896
        %v1507 = vunpack.c.l.b16 %v897
        %v1508 = vunpack.c.h.b16 %v897
        %v1509 = vunpack.c.l.b16 %v898
        %v1510 = vpack.c.b16 %v1507, %v1504
        %v1511 = vpack.c.b16 %v1508, %v1505
        %v1512 = vpack.c.b16 %v1509, %v1506
        %1513 = vrot.lane.b32.xlu0 %v1510, 120
        %v1514 = vpop.permute.xlu0 %1513
        %1515 = vrot.lane.b32.xlu0 %v1511, 120
        %v1516 = vpop.permute.xlu0 %1515
        %1517 = vrot.lane.b32.xlu0 %v1512, 120
        %v1518 = vpop.permute.xlu0 %1517
        %vm1519 = vcmask 982016
        %v1520 = vsel %vm1519, %v1514, %v1516
        %v1521 = vsel %vm1519, %v1516, %v1518
        %1522 = vrot.lane.b32.xlu0 %v1489, 64
        %v1523 = vpop.permute.xlu0 %1522
        %1524 = vrot.lane.b32.xlu0 %v1490, 64
        %v1525 = vpop.permute.xlu0 %1524
        %1526 = vrot.lane.b32.xlu0 %v1491, 64
        %v1527 = vpop.permute.xlu0 %1526
        %v1528 = vsel %vm1295, %v1523, %v1525
        %v1529 = vsel %vm1295, %v1525, %v1527
        %1530 = vrot.lane.b32.xlu0 %v914, 60
        %v1531 = vpop.permute.xlu0 %1530
        %1532 = vrot.lane.b32.xlu0 %v915, 60
        %v1533 = vpop.permute.xlu0 %1532
        %v1534 = vsel %vm1313, %v1531, %v1533
        %v1535 = vunpack.c.h.b16 %v896
        %v1536 = vunpack.c.h.b16 %v898
        %v1537 = vpack.c.b16 %v1536, %v1535
        %1538 = vrot.lane.b32.xlu0 %v1511, 56
        %v1539 = vpop.permute.xlu0 %1538
        %1540 = vrot.lane.b32.xlu0 %v1512, 56
        %v1541 = vpop.permute.xlu0 %1540
        %1542 = vrot.lane.b32.xlu0 %v1537, 56
        %v1543 = vpop.permute.xlu0 %1542
        %vm1544 = vcmask 457728
        %v1545 = vsel %vm1544, %v1539, %v1541
        %v1546 = vsel %vm1544, %v1541, %v1543
        %v1547 = vunpack.c.h.b16 %v814
        %v1548 = vunpack.c.h.b16 %v816
        %v1549 = vpack.c.b16 %v1548, %v1547
        %1550 = vrot.lane.b32.xlu0 %v1038, 124
        %v1551 = vpop.permute.xlu0 %1550
        %v1552 = vsel %vm1258, %v1497, %v1551
        %1553 = vrot.lane.b32.xlu0 %v1537, 120
        %v1554 = vpop.permute.xlu0 %1553
        %v1555 = vsel %vm1519, %v1518, %v1554
        %s1556 = scalar_lea.vmem %s3, 16
        %v1557 = vld [vmem:[%s1556] sm:$0xff]
        %s1558 = scalar_lea.vmem %s4, 16
        %v1559 = vld [vmem:[%s1558] sm:$0xff]
        %1561 = vset.pattern.permute.xlu0 0
        %1562 = vperm.xlu0 %1561, %v1559
        %v1563 = vpop.permute.xlu0 %1562
        %v1566 = vunpack.c.l.b16 %v1557
        %v1567 = vunpack.c.h.b16 %v1557
        %v1568 = vpack.c.b16 %v1566, %v1566
        %v1569 = vpack.c.b16 %v1567, %v1567
        %1571 = vrot.lane.b32.xlu0 %v1489, 68
        %v1572 = vpop.permute.xlu0 %1571
        %1573 = vrot.lane.b32.xlu0 %v1490, 68
        %v1574 = vpop.permute.xlu0 %1573
        %1575 = vrot.lane.b32.xlu0 %v1491, 68
        %v1576 = vpop.permute.xlu0 %1575
        %1577 = vrot.lane.b32.xlu0 %v1498, 68
        %v1578 = vpop.permute.xlu0 %1577
        %1579 = vrot.lane.b32.xlu0 %v1499, 68
        %v1580 = vpop.permute.xlu0 %1579
        %1581 = vrot.lane.b32.xlu0 %v1497, 68
        %v1582 = vpop.permute.xlu0 %1581
        %1583 = vrot.lane.b32.xlu0 %v1520, 68
        %v1584 = vpop.permute.xlu0 %1583
        %1585 = vrot.lane.b32.xlu0 %v1521, 68
        %v1586 = vpop.permute.xlu0 %1585
        %1587 = vrot.lane.b32.xlu0 %v1518, 68
        %v1588 = vpop.permute.xlu0 %1587
        %1589 = vrot.lane.b32.xlu0 %v1528, 68
        %v1590 = vpop.permute.xlu0 %1589
        %1591 = vrot.lane.b32.xlu0 %v1529, 68
        %v1592 = vpop.permute.xlu0 %1591
        %1593 = vrot.lane.b32.xlu0 %v1527, 68
        %v1594 = vpop.permute.xlu0 %1593
        %1595 = vrot.lane.b32.xlu0 %v1531, 68
        %v1596 = vpop.permute.xlu0 %1595
        %1597 = vrot.lane.b32.xlu0 %v1534, 68
        %v1598 = vpop.permute.xlu0 %1597
        %1599 = vrot.lane.b32.xlu0 %v1533, 68
        %v1600 = vpop.permute.xlu0 %1599
        %1601 = vrot.lane.b32.xlu0 %v1539, 68
        %v1602 = vpop.permute.xlu0 %1601
        %1603 = vrot.lane.b32.xlu0 %v1545, 68
        %v1604 = vpop.permute.xlu0 %1603
        %1605 = vrot.lane.b32.xlu0 %v1546, 68
        %v1606 = vpop.permute.xlu0 %1605
        %1607 = vrot.lane.b32.xlu0 %v1549, 68
        %v1608 = vpop.permute.xlu0 %1607
        %1609 = vrot.lane.b32.xlu0 %v1552, 68
        %v1610 = vpop.permute.xlu0 %1609
        %1611 = vrot.lane.b32.xlu0 %v1551, 68
        %v1612 = vpop.permute.xlu0 %1611
        %1613 = vrot.lane.b32.xlu0 %v1555, 68
        %v1614 = vpop.permute.xlu0 %1613
        %1615 = vrot.lane.b32.xlu0 %v1554, 68
        %v1616 = vpop.permute.xlu0 %1615
        %vm1617 = vcmask 556032
        %v1618 = vsel %vm1617, %v1572, %v1574
        %v1619 = vsel %vm1617, %v1574, %v1576
        %v1620 = vsel %vm1617, %v1578, %v1580
        %v1621 = vsel %vm1617, %v1580, %v1582
        %v1622 = vsel %vm1617, %v1584, %v1586
        %v1623 = vsel %vm1617, %v1586, %v1588
        %v1624 = vsel %vm1617, %v1590, %v1592
        %v1625 = vsel %vm1617, %v1592, %v1594
        %v1626 = vsel %vm1617, %v1596, %v1598
        %v1627 = vsel %vm1617, %v1598, %v1600
        %v1628 = vsel %vm1617, %v1602, %v1604
        %v1629 = vsel %vm1617, %v1604, %v1606
        %v1630 = vsel %vm1617, %v1576, %v1608
        %v1631 = vsel %vm1617, %v1580, %v1610
        %v1632 = vsel %vm1617, %v1610, %v1612
        %v1633 = vsel %vm1617, %v1586, %v1614
        %v1634 = vsel %vm1617, %v1614, %v1616
        %v1653 = vsel %vm918, %v1569, 0
        %1655 = vmatpush.bf16.msra.mxu0 %v1631
        %1656 = vmatpush.bf16.msra.mxu0 %v1619
        %1657 = vmatpush.bf16.msra.mxu0 %v1628
        %1658 = vmatpush.bf16.msra.mxu0 %v1626
        %1659 = vmatpush.bf16.msra.mxu0 %v1624
        %1660 = vmatpush.bf16.msra.mxu0 %v1622
        %1661 = vmatpush.bf16.msra.mxu0 %v1620
        %1662 = vmatpush.bf16.msra.mxu0 %v1618
        %1663 = vmatmul.bf16.gmra.mxu0 %v1568
        %v1664 = vpop.f32.mrf.mxu0
        %v1665 = vadd.f32 %v1563, %v1664
        %v1666 = vpop.f32.mrf.mxu0
        %1667 = vdwg.mxu0
        %1668 = vmatpush.bf16.msra.mxu0 0
        %1669 = vmatpush.bf16.msra.mxu0 0
        %1670 = vmatpush.bf16.msra.mxu0 0
        %1671 = vmatpush.bf16.msra.mxu0 0
        %1672 = vmatpush.bf16.msra.mxu0 0
        %1673 = vmatpush.bf16.msra.mxu0 0
        %1674 = vmatpush.bf16.msra.mxu0 0
        %1675 = vmatpush.bf16.msra.mxu0 %v1633
        %1676 = vmatmul.bf16.gmra.mxu0 %v1653
        %v1677 = vpop.f32.mrf.mxu0
        %v1678 = vadd.f32 %v1665, %v1677
        %v1679 = vpop.f32.mrf.mxu0
        %1680 = vdwg.mxu0
        %1681 = vmatpush.bf16.msra.mxu0 %v1632
        %1682 = vmatpush.bf16.msra.mxu0 %v1630
        %1683 = vmatpush.bf16.msra.mxu0 %v1629
        %1684 = vmatpush.bf16.msra.mxu0 %v1627
        %1685 = vmatpush.bf16.msra.mxu0 %v1625
        %1686 = vmatpush.bf16.msra.mxu0 %v1623
        %1687 = vmatpush.bf16.msra.mxu0 %v1621
        %1688 = vmatpush.bf16.msra.mxu0 %v1619
        %1689 = vmatmul.bf16.gmra.mxu0 %v1568
        %v1690 = vpop.f32.mrf.mxu0
        %v1691 = vadd.f32 %v1563, %v1690
        %v1692 = vpop.f32.mrf.mxu0
        %1693 = vdwg.mxu0
        %1694 = vmatpush.bf16.msra.mxu0 0
        %1695 = vmatpush.bf16.msra.mxu0 0
        %1696 = vmatpush.bf16.msra.mxu0 0
        %1697 = vmatpush.bf16.msra.mxu0 0
        %1698 = vmatpush.bf16.msra.mxu0 0
        %1699 = vmatpush.bf16.msra.mxu0 0
        %1700 = vmatpush.bf16.msra.mxu0 0
        %1701 = vmatpush.bf16.msra.mxu0 %v1634
        %1702 = vmatmul.bf16.gmra.mxu0 %v1653
        %v1703 = vpop.f32.mrf.mxu0
        %v1704 = vadd.f32 %v1691, %v1703
        %v1705 = vpop.f32.mrf.mxu0
        %1706 = vdwg.mxu0
        %v1707 = vmax.f32 %v1678, 0.0
        %v1708 = vmax.f32 %v1704, 0.0
        %v1709 = vld [vmem:[%s7] sm:$0xf]
        %v1710 = vld [vmem:[%s7 + $0x4] sm:$0xf]
        %v1711 = vld [vmem:[%s7 + $0x8] sm:$0xf]
        %v1712 = vld [vmem:[%s7 + $0xc] sm:$0xf]
        %v1713 = vld [vmem:[%s7 + $0x10] sm:$0xf]
        %v1714 = vld [vmem:[%s7 + $0x14] sm:$0xf]
        %v1715 = vld [vmem:[%s7 + $0x18] sm:$0xf]
        %v1716 = vld [vmem:[%s7 + $0x1c] sm:$0xf]
        %v1717 = vld [vmem:[%s7 + $0x20] sm:$0xf]
        %v1718 = vld [vmem:[%s7 + $0x24] sm:$0xf]
        %v1719 = vld [vmem:[%s7 + $0x28] sm:$0xf]
        %v1720 = vld [vmem:[%s7 + $0x2c] sm:$0xf]
        %v1721 = vld [vmem:[%s7 + $0x30] sm:$0xf]
        %v1722 = vld [vmem:[%s7 + $0x34] sm:$0xf]
        %v1723 = vld [vmem:[%s7 + $0x38] sm:$0xf]
        %v1724 = vld [vmem:[%s7 + $0x3c] sm:$0xf]
        %v1725 = vld [vmem:[%s7 + $0x40] sm:$0xf]
        %v1726 = vld [vmem:[%s7 + $0x44] sm:$0xf]
        %v1727 = vld [vmem:[%s7 + $0x48] sm:$0xf]
        %v1728 = vld [vmem:[%s7 + $0x4c] sm:$0xf]
        %v1729 = vld [vmem:[%s7 + $0x50] sm:$0xf]
        %v1730 = vld [vmem:[%s7 + $0x54] sm:$0xf]
        %v1731 = vld [vmem:[%s7 + $0x58] sm:$0xf]
        %v1732 = vld [vmem:[%s7 + $0x5c] sm:$0xf]
        %v1733 = vld [vmem:[%s7 + $0x60] sm:$0xf]
        %v1734 = vld [vmem:[%s7 + $0x64] sm:$0xf]
        %v1735 = vld [vmem:[%s7 + $0x68] sm:$0xf]
        %v1736 = vld [vmem:[%s7 + $0x6c] sm:$0xf]
        %v1737 = vld [vmem:[%s7 + $0x70] sm:$0xf]
        %v1738 = vld [vmem:[%s7 + $0x74] sm:$0xf]
        %v1739 = vld [vmem:[%s7 + $0x78] sm:$0xf]
        %v1740 = vld [vmem:[%s7 + $0x7c] sm:$0xf]
        %v1773 = vunpack.c.l.b16 %v1709
        %v1774 = vunpack.c.l.b16 %v1710
        %v1775 = vunpack.c.l.b16 %v1711
        %v1776 = vunpack.c.l.b16 %v1712
        %v1777 = vunpack.c.l.b16 %v1713
        %v1778 = vunpack.c.l.b16 %v1714
        %v1779 = vunpack.c.l.b16 %v1715
        %v1780 = vunpack.c.l.b16 %v1716
        %v1781 = vunpack.c.l.b16 %v1717
        %v1782 = vunpack.c.l.b16 %v1718
        %v1783 = vunpack.c.l.b16 %v1719
        %v1784 = vunpack.c.l.b16 %v1720
        %v1785 = vunpack.c.l.b16 %v1721
        %v1786 = vunpack.c.l.b16 %v1722
        %v1787 = vunpack.c.l.b16 %v1723
        %v1788 = vunpack.c.l.b16 %v1724
        %v1789 = vunpack.c.l.b16 %v1725
        %v1790 = vunpack.c.l.b16 %v1726
        %v1791 = vunpack.c.l.b16 %v1727
        %v1792 = vunpack.c.l.b16 %v1728
        %v1793 = vunpack.c.l.b16 %v1729
        %v1794 = vunpack.c.l.b16 %v1730
        %v1795 = vunpack.c.l.b16 %v1731
        %v1796 = vunpack.c.l.b16 %v1732
        %v1797 = vunpack.c.l.b16 %v1733
        %v1798 = vunpack.c.l.b16 %v1734
        %v1799 = vunpack.c.l.b16 %v1735
        %v1800 = vunpack.c.l.b16 %v1736
        %v1801 = vunpack.c.l.b16 %v1737
        %v1802 = vunpack.c.l.b16 %v1738
        %v1803 = vunpack.c.l.b16 %v1739
        %v1804 = vunpack.c.l.b16 %v1740
        %v1805 = vpack.c.b16 %v1774, %v1773
        %v1806 = vpack.c.b16 %v1776, %v1775
        %v1807 = vpack.c.b16 %v1778, %v1777
        %v1808 = vpack.c.b16 %v1780, %v1779
        %v1809 = vpack.c.b16 %v1782, %v1781
        %v1810 = vpack.c.b16 %v1784, %v1783
        %v1811 = vpack.c.b16 %v1786, %v1785
        %v1812 = vpack.c.b16 %v1788, %v1787
        %v1813 = vpack.c.b16 %v1790, %v1789
        %v1814 = vpack.c.b16 %v1792, %v1791
        %v1815 = vpack.c.b16 %v1794, %v1793
        %v1816 = vpack.c.b16 %v1796, %v1795
        %v1817 = vpack.c.b16 %v1798, %v1797
        %v1818 = vpack.c.b16 %v1800, %v1799
        %v1819 = vpack.c.b16 %v1802, %v1801
        %v1820 = vpack.c.b16 %v1804, %v1803
        %1837 = vmatpush.bf16.msra.mxu0 %v1812
        %1838 = vmatpush.bf16.msra.mxu0 %v1811
        %1839 = vmatpush.bf16.msra.mxu0 %v1810
        %1840 = vmatpush.bf16.msra.mxu0 %v1809
        %1841 = vmatpush.bf16.msra.mxu0 %v1808
        %1842 = vmatpush.bf16.msra.mxu0 %v1807
        %1843 = vmatpush.bf16.msra.mxu0 %v1806
        %1844 = vmatpush.bf16.msra.mxu0 %v1805
        %1845 = vmatmul.bf16.gmra.mxu0 %v914
        %v1846 = vpop.f32.mrf.mxu0
        %v1847 = vadd.f32 0.0, %v1846
        %v1848 = vpop.f32.mrf.mxu0
        %v1849 = vadd.f32 0.0, %v1848
        %1850 = vdwg.mxu0
        %1851 = vmatpush.bf16.msra.mxu0 %v1820
        %1852 = vmatpush.bf16.msra.mxu0 %v1819
        %1853 = vmatpush.bf16.msra.mxu0 %v1818
        %1854 = vmatpush.bf16.msra.mxu0 %v1817
        %1855 = vmatpush.bf16.msra.mxu0 %v1816
        %1856 = vmatpush.bf16.msra.mxu0 %v1815
        %1857 = vmatpush.bf16.msra.mxu0 %v1814
        %1858 = vmatpush.bf16.msra.mxu0 %v1813
        %1859 = vmatmul.bf16.gmra.mxu0 %v915
        %v1860 = vpop.f32.mrf.mxu0
        %v1861 = vadd.f32 %v1847, %v1860
        %v1862 = vpop.f32.mrf.mxu0
        %v1863 = vadd.f32 %v1849, %v1862
        %1864 = vdwg.mxu0
        %v1865 = vpack.c.bf16 %v1863, %v1861
        %v1866 = vld [vmem:[%s5] sm:$0xf]
        %v1867 = vld [vmem:[%s6] sm:$0xff]
        %1869 = vset.pattern.permute.xlu0 0
        %1870 = vperm.xlu0 %1869, %v1867
        %v1871 = vpop.permute.xlu0 %1870
        %v1874 = vsel %vm918, %v1866, 0
        %1876 = vmatpush.bf16.msra.mxu0 0
        %1877 = vmatpush.bf16.msra.mxu0 0
        %1878 = vmatpush.bf16.msra.mxu0 0
        %1879 = vmatpush.bf16.msra.mxu0 0
        %1880 = vmatpush.bf16.msra.mxu0 0
        %1881 = vmatpush.bf16.msra.mxu0 0
        %1882 = vmatpush.bf16.msra.mxu0 0
        %1883 = vmatpush.bf16.msra.mxu0 %v1865
        %1884 = vmatmul.bf16.gmra.mxu0 %v1874
        %v1885 = vpop.f32.mrf.mxu0
        %v1886 = vadd.f32 %v1871, %v1885
        %v1887 = vpop.f32.mrf.mxu0
        %1888 = vdwg.mxu0
        %v1889 = vmax.f32 %v1886, 0.0
        %v1890 = vpack.c.bf16 %v1889, %v1889
        %v1891 = vld [vmem:[%s8] sm:$0xff]
        %v1892 = vld [vmem:[%s8 + $0x8] sm:$0xff]
        %v1893 = vld [vmem:[%s8 + $0x10] sm:$0xff]
        %v1894 = vld [vmem:[%s8 + $0x18] sm:$0xff]
        %v1895 = vld [vmem:[%s8 + $0x20] sm:$0xff]
        %v1896 = vld [vmem:[%s8 + $0x28] sm:$0xff]
        %v1897 = vld [vmem:[%s8 + $0x30] sm:$0xff]
        %v1898 = vld [vmem:[%s8 + $0x38] sm:$0xff]
        %v1907 = vunpack.c.l.b16 %v1891
        %v1908 = vunpack.c.h.b16 %v1891
        %v1909 = vunpack.c.l.b16 %v1892
        %v1910 = vunpack.c.h.b16 %v1892
        %v1911 = vunpack.c.l.b16 %v1893
        %v1912 = vunpack.c.h.b16 %v1893
        %v1913 = vunpack.c.l.b16 %v1894
        %v1914 = vunpack.c.h.b16 %v1894
        %v1915 = vunpack.c.l.b16 %v1895
        %v1916 = vunpack.c.h.b16 %v1895
        %v1917 = vunpack.c.l.b16 %v1896
        %v1918 = vunpack.c.h.b16 %v1896
        %v1919 = vunpack.c.l.b16 %v1897
        %v1920 = vunpack.c.h.b16 %v1897
        %v1921 = vunpack.c.l.b16 %v1898
        %v1922 = vunpack.c.h.b16 %v1898
        %v1923 = vpack.c.b16 %v1909, %v1907
        %v1924 = vpack.c.b16 %v1910, %v1908
        %v1925 = vpack.c.b16 %v1913, %v1911
        %v1926 = vpack.c.b16 %v1914, %v1912
        %v1927 = vpack.c.b16 %v1917, %v1915
        %v1928 = vpack.c.b16 %v1918, %v1916
        %v1929 = vpack.c.b16 %v1921, %v1919
        %v1930 = vpack.c.b16 %v1922, %v1920
        %vm1939 = vcmask 523264
        %v1941 = vsel %vm1939, %v1890, 0
        %1943 = vmatpush.bf16.msra.mxu0 0
        %1944 = vmatpush.bf16.msra.mxu0 0
        %1945 = vmatpush.bf16.msra.mxu0 0
        %1946 = vmatpush.bf16.msra.mxu0 0
        %1947 = vmatpush.bf16.msra.mxu0 %v1929
        %1948 = vmatpush.bf16.msra.mxu0 %v1927
        %1949 = vmatpush.bf16.msra.mxu0 %v1925
        %1950 = vmatpush.bf16.msra.mxu0 %v1923
        %1951 = vmatmul.bf16.gmra.mxu0 %v1941
        %v1952 = vpop.f32.mrf.mxu0
        %v1953 = vadd.f32 0.0, %v1952
        %v1954 = vpop.f32.mrf.mxu0
        %1955 = vdwg.mxu0
        %1956 = vmatpush.bf16.msra.mxu0 0
        %1957 = vmatpush.bf16.msra.mxu0 0
        %1958 = vmatpush.bf16.msra.mxu0 0
        %1959 = vmatpush.bf16.msra.mxu0 0
        %1960 = vmatpush.bf16.msra.mxu0 %v1930
        %1961 = vmatpush.bf16.msra.mxu0 %v1928
        %1962 = vmatpush.bf16.msra.mxu0 %v1926
        %1963 = vmatpush.bf16.msra.mxu0 %v1924
        %1964 = vmatmul.bf16.gmra.mxu0 %v1941
        %v1965 = vpop.f32.mrf.mxu0
        %v1966 = vadd.f32 0.0, %v1965
        %v1967 = vpop.f32.mrf.mxu0
        %1968 = vdwg.mxu0
        %v1969 = vpack.c.bf16 %v1216, %v948
        %v1970 = vpack.c.bf16 %v1217, %v949
        %v1971 = vpack.c.bf16 %v1707, %v1477
        %v1972 = vpack.c.bf16 %v1708, %v1478
        %v1973 = vpack.c.bf16 %v1953, %v1953
        %v1974 = vpack.c.bf16 %v1966, %v1966
        %v1975 = vld [vmem:[%s9] sm:$0xf]
        %v1976 = vld [vmem:[%s10] sm:$0xff]
        %1978 = vset.pattern.permute.xlu0 0
        %1979 = vperm.xlu0 %1978, %v1976
        %v1980 = vpop.permute.xlu0 %1979
        %vm1982 = vcmask 326656
        %v1984 = vsel %vm1982, %v1975, 0
        %vm1986 = vcmask 1043456
        %v1988 = vsel %vm1986, %v1973, 0
        %v1991 = vsel %vm1986, %v1974, 0
        %1993 = vmatpush.bf16.msra.mxu0 0
        %1994 = vmatpush.bf16.msra.mxu0 0
        %1995 = vmatpush.bf16.msra.mxu0 0
        %1996 = vmatpush.bf16.msra.mxu0 0
        %1997 = vmatpush.bf16.msra.mxu0 0
        %1998 = vmatpush.bf16.msra.mxu0 %v1988
        %1999 = vmatpush.bf16.msra.mxu0 %v1971
        %2000 = vmatpush.bf16.msra.mxu0 %v1969
        %2001 = vmatmul.bf16.gmra.mxu0 %v1984
        %v2002 = vpop.f32.mrf.mxu0
        %v2003 = vadd.f32 %v1980, %v2002
        %v2004 = vpop.f32.mrf.mxu0
        %2005 = vdwg.mxu0
        %2006 = vmatpush.bf16.msra.mxu0 0
        %2007 = vmatpush.bf16.msra.mxu0 0
        %2008 = vmatpush.bf16.msra.mxu0 0
        %2009 = vmatpush.bf16.msra.mxu0 0
        %2010 = vmatpush.bf16.msra.mxu0 0
        %2011 = vmatpush.bf16.msra.mxu0 %v1991
        %2012 = vmatpush.bf16.msra.mxu0 %v1972
        %2013 = vmatpush.bf16.msra.mxu0 %v1970
        %2014 = vmatmul.bf16.gmra.mxu0 %v1984
        %v2015 = vpop.f32.mrf.mxu0
        %v2016 = vadd.f32 %v1980, %v2015
        %v2017 = vpop.f32.mrf.mxu0
        %2018 = vdwg.mxu0
        %v2019 = vmax.f32 %v2003, 0.0
        %v2020 = vmax.f32 %v2016, 0.0
        %2021 = vst [vmem:[%s379] sm:$0xff] %v2019
        %2022 = vst [vmem:[%s379 + $0x8] sm:$0xff] %v2020
        %s2023 = sand.u32 %s269, 1
        %s2024 = scalar_lea.sflag [#allocation4], %s2023
        %s2025 = sand.u32 %s269, 1
        %s2026 = smul.addr %s2025, 16
        %s2027 = scalar_lea.vmem [#allocation3], %s2026
        // Predicated region
        $region65: #{tpu_custom_call.1} parent=63 // pred_check
          %p2028 = pneg %p279
        $region66: #{tpu_custom_call.1} parent=63 // pred_check_branch
          %2030 = sbr.rel (%p2028) target = $region68
        $region67: #{tpu_custom_call.1} parent=63 // pred_region
          %2032 = vsyncadd %s2024, 0
          %s2033 = smul.addr %s25, 2
          %s2034 = smul.addr %s2033, 8
          %s2035 = scalar_lea.hbm %s11, %s2034
          %s2037 = sshll.u32 %s2027, 4
          %s2038 = int_to_ptr.vmem [resolvable:$true] %s2037
          %s2039 = sshll.u32 %s2035, 4
          %s2040 = int_to_ptr.hbm [resolvable:$true] %s2039
          %2042 = dma.vmem_to_hbm [thread:$0]  %s2038, 256, %s2040, %s2024
        $region68: #{tpu_custom_call.1} parent=63 // pred_fallthru
          _
      $region64: #{tpu_custom_call.1} parent=5 // pred_fallthru
        _
      %p2043 = scmp.le.s32.totalorder 2, %s20
      // Predicated region
      $region69: #{tpu_custom_call.1} parent=5 // pred_check
        %p2044 = pneg %p2043
      $region70: #{tpu_custom_call.1} parent=5 // pred_check_branch
        %2046 = sbr.rel (%p2044) target = $region72
      $region71: #{tpu_custom_call.1} parent=5 // pred_region
        %s2047 = ssub.s32 %s20, 2
        // Predicated region
        $region73: #{tpu_custom_call.1} parent=71 // pred_check
          %p2048 = pneg %p285
        $region74: #{tpu_custom_call.1} parent=71 // pred_check_branch
          %2050 = sbr.rel (%p2048) target = $region76
        $region75: #{tpu_custom_call.1} parent=71 // pred_region
          %s2051 = sand.u32 %s270, 1
          %s2052 = scalar_lea.sflag [#allocation4], %s2051
          %s2053 = sand.u32 %s270, 1
          %s2054 = smul.addr %s2053, 16
          %s2055 = scalar_lea.vmem [#allocation3], %s2054
          %2057 = dma.done %s2052, 256
        $region76: #{tpu_custom_call.1} parent=71 // pred_fallthru
          _
      $region72: #{tpu_custom_call.1} parent=5 // pred_fallthru
        _
    $region6: #{tpu_custom_call.1} parent=1 // loop_footer
      %s24 = sadd.s32 1, %s20
    $region7: #{tpu_custom_call.1} parent=1 // loop_footer_branch
      %19 = sbr.rel target = $region3
    $region8: #{tpu_custom_call.1} parent=1 // loop_exit
      _
    %2058 = vsyncpa [#allocation4], 1
    %s2059 = scalar_lea.sflag [#allocation4], 1
    %2060 = vsyncpa %s2059, 1

</llo_original>
